<compile_context>
chip_gen: v7x
topology: tpu7x:2x2x1
jax: 0.10.0
libtpu: 0.0.40
codegen_flags: <defaults>
</compile_context>

<pallas_src>
import functools
import math

import jax
import jax.numpy as jnp
import numpy as np
from jax.experimental import pallas as pl
from jax.experimental.pallas import tpu as pltpu


def _round_up(x, m):
    return ((x + m - 1) // m) * m


# ----------------------------------------------------------------------------
# Fused tiled matmul + bias + SiLU (the conv workhorse)
# ----------------------------------------------------------------------------
def _matmul_bias_act_kernel(x_ref, w_ref, b_ref, o_ref, acc_ref, *, act):
    @pl.when(pl.program_id(2) == 0)
    def _():
        acc_ref[...] = jnp.zeros_like(acc_ref)

    acc_ref[...] += jnp.dot(x_ref[...], w_ref[...],
                            preferred_element_type=jnp.float32)

    @pl.when(pl.program_id(2) == pl.num_programs(2) - 1)
    def _():
        acc = acc_ref[...] + b_ref[...]          # (1, tn) broadcast over tm
        if act == "silu":
            acc = acc * jax.nn.sigmoid(acc)
        o_ref[...] = acc.astype(o_ref.dtype)


def fused_matmul_bias_act(x2d, w2d, b, act):
    """(M,K) @ (K,N) + bias [+ SiLU]; bf16 MXU inputs, f32 accumulate/output."""
    M, K = x2d.shape
    K2, N = w2d.shape
    assert K2 == K

    # --- tile sizes: lane-dense N, modest M/K tiles that fit VMEM everywhere --
    Mp = _round_up(M, 8)
    tm = Mp if Mp <= 512 else 512
    Mp = _round_up(M, tm)

    Kp = _round_up(K, 128)
    tk = Kp if Kp <= 512 else 512
    Kp = _round_up(K, tk)

    Np = _round_up(N, 128)
    if Np <= 512:
        tn = Np
    else:
        tn = 256 if Np % 256 == 0 else 128

    xp = jnp.pad(x2d, ((0, Mp - M), (0, Kp - K))).astype(jnp.bfloat16)
    wp = jnp.pad(w2d, ((0, Kp - K), (0, Np - N))).astype(jnp.bfloat16)
    bp = jnp.pad(b.reshape(1, N).astype(jnp.float32), ((0, 0), (0, Np - N)))

    kern = functools.partial(_matmul_bias_act_kernel, act=act)
    yp = pl.pallas_call(
        kern,
        out_shape=jax.ShapeDtypeStruct((Mp, Np), jnp.float32),
        grid_spec=pltpu.PrefetchScalarGridSpec(
            num_scalar_prefetch=0,
            grid=(Mp // tm, Np // tn, Kp // tk),
            in_specs=[
                pl.BlockSpec((tm, tk), lambda i, j, k: (i, k)),
                pl.BlockSpec((tk, tn), lambda i, j, k: (k, j)),
                pl.BlockSpec((1, tn), lambda i, j, k: (0, j)),
            ],
            out_specs=pl.BlockSpec((tm, tn), lambda i, j, k: (i, j)),
            scratch_shapes=[pltpu.VMEM((tm, tn), jnp.float32)],
        ),
        compiler_params=pltpu.CompilerParams(
            dimension_semantics=("parallel", "parallel", "arbitrary")),
    )(xp, wp, bp)
    return yp[:M, :N]


# ----------------------------------------------------------------------------
# YOLOX head decode, lane-dense (anchors on lanes, channels on sublanes)
# ----------------------------------------------------------------------------
def _decode_kernel(p_ref, g_ref, s_ref, o_ref):
    """rows 0..1: (p + grid) * stride; rows 2..3: exp(p) * stride; rows 4.. : sigmoid(p)."""
    p = p_ref[...]                   # (D, tn)
    g = g_ref[...]                   # (2, tn)
    s = s_ref[...]                   # (1, tn)
    xy = (p[0:2, :] + g) * s
    wh = jnp.exp(p[2:4, :]) * s
    sc = jax.nn.sigmoid(p[4:, :])
    o_ref[...] = jnp.concatenate([xy, wh, sc], axis=0)


def decode_predictions(p_t, grid_t, stride_t):
    """p_t: (D, M) channel-major raw predictions; returns decoded (D, M)."""
    D, M = p_t.shape
    Mp = _round_up(M, 128)
    if Mp <= 512:
        tn = Mp
    else:
        tn = 512
        Mp = _round_up(M, tn)

    pp = jnp.pad(p_t, ((0, 0), (0, Mp - M)))
    gp = jnp.pad(grid_t, ((0, 0), (0, Mp - M)))
    sp = jnp.pad(stride_t, ((0, 0), (0, Mp - M)))

    yp = pl.pallas_call(
        _decode_kernel,
        out_shape=jax.ShapeDtypeStruct((D, Mp), jnp.float32),
        grid=(Mp // tn,),
        in_specs=[
            pl.BlockSpec((D, tn), lambda i: (0, i)),
            pl.BlockSpec((2, tn), lambda i: (0, i)),
            pl.BlockSpec((1, tn), lambda i: (0, i)),
        ],
        out_specs=pl.BlockSpec((D, tn), lambda i: (0, i)),
        compiler_params=pltpu.CompilerParams(
            dimension_semantics=("parallel",)),
    )(pp, gp, sp)
    return yp[:, :M]


# ----------------------------------------------------------------------------
# Conv-as-matmul glue (im2col in JAX/bf16, tiled matmul in Pallas)
# ----------------------------------------------------------------------------
def _im2col(x_nhwc, k, stride, pad):
    N, H, W, C = x_nhwc.shape
    if k == 1 and stride == 1 and pad == 0:
        return x_nhwc, H, W
    xp = jnp.pad(x_nhwc, ((0, 0), (pad, pad), (pad, pad), (0, 0)))
    Ho = (H + 2 * pad - k) // stride + 1
    Wo = (W + 2 * pad - k) // stride + 1
    cols = []
    for i in range(k):
        for j in range(k):
            cols.append(
                xp[:, i:i + (Ho - 1) * stride + 1:stride,
                      j:j + (Wo - 1) * stride + 1:stride, :])
    patches = jnp.concatenate(cols, axis=-1)   # (N, Ho, Wo, k*k*C), (i,j,c) order
    return patches, Ho, Wo


def conv2d(x_nhwc, w_oihw, b, *, stride=1, act="silu"):
    """Conv + (folded BN) bias + SiLU. Weight is PyTorch-layout (Cout,Cin,kh,kw)."""
    cout, cin, k, _ = w_oihw.shape
    pad = (k - 1) // 2
    x_bf16 = x_nhwc.astype(jnp.bfloat16)       # halve im2col HBM footprint
    patches, Ho, Wo = _im2col(x_bf16, k, stride, pad)
    Nb = x_nhwc.shape[0]
    x2d = patches.reshape(Nb * Ho * Wo, k * k * cin)
    w2d = jnp.transpose(w_oihw, (2, 3, 1, 0)).reshape(k * k * cin, cout)
    y2d = fused_matmul_bias_act(x2d, w2d, b, act)
    return y2d.reshape(Nb, Ho, Wo, cout)


# ----------------------------------------------------------------------------
# Deterministic parameter init (synthetic; BN assumed folded into conv bias)
# ----------------------------------------------------------------------------
def _init_conv(key, cin, cout, k):
    kw, kb = jax.random.split(key)
    fan_in = cin * k * k
    w = jax.random.normal(kw, (cout, cin, k, k), jnp.float32) / math.sqrt(fan_in)
    b = 0.01 * jax.random.normal(kb, (cout,), jnp.float32)
    return {"w": w, "b": b}


# ----------------------------------------------------------------------------
# Minimal YOLOX-style backbone (FPN) and decoupled head
# ----------------------------------------------------------------------------
class TinyBackbone:
    """Produces 3 FPN feature maps at strides (4, 8, 16) with widening channels."""

    def __init__(self, key, in_ch=3, base=8):
        ks = jax.random.split(key, 4)
        self.strides = (4, 8, 16)
        self.out_channels = (base * 2, base * 4, base * 8)
        self.stem = _init_conv(ks[0], in_ch, base, 3)            # /2
        self.d2 = _init_conv(ks[1], base, base * 2, 3)           # /4
        self.d3 = _init_conv(ks[2], base * 2, base * 4, 3)       # /8
        self.d4 = _init_conv(ks[3], base * 4, base * 8, 3)       # /16

    def __call__(self, x_nhwc):
        c1 = conv2d(x_nhwc, self.stem["w"], self.stem["b"], stride=2)
        c2 = conv2d(c1, self.d2["w"], self.d2["b"], stride=2)
        c3 = conv2d(c2, self.d3["w"], self.d3["b"], stride=2)
        c4 = conv2d(c3, self.d4["w"], self.d4["b"], stride=2)
        return (c2, c3, c4)


class TinyYOLOXHead:
    """YOLOX decoupled head, inference path with decode_in_inference=True."""

    def __init__(self, key, num_classes, in_channels, strides, hidden=16):
        self.num_classes = num_classes
        self.strides = strides
        self.hidden = hidden
        self.stems, self.cls_convs, self.reg_convs = [], [], []
        self.cls_preds, self.reg_preds, self.obj_preds = [], [], []
        keys = jax.random.split(key, 6 * len(in_channels))
        ki = 0
        for cin in in_channels:
            self.stems.append(_init_conv(keys[ki], cin, hidden, 1)); ki += 1
            self.cls_convs.append(_init_conv(keys[ki], hidden, hidden, 3)); ki += 1
            self.reg_convs.append(_init_conv(keys[ki], hidden, hidden, 3)); ki += 1
            self.cls_preds.append(_init_conv(keys[ki], hidden, num_classes, 1)); ki += 1
            self.reg_preds.append(_init_conv(keys[ki], hidden, 4, 1)); ki += 1
            self.obj_preds.append(_init_conv(keys[ki], hidden, 1, 1)); ki += 1

    def __call__(self, fpn_outs):
        B = fpn_outs[0].shape[0]
        nc = self.num_classes
        D = 5 + nc
        h = self.hidden
        level_outs, grid_rows, stride_rows = [], [], []
        for lvl, feat in enumerate(fpn_outs):
            x = conv2d(feat, self.stems[lvl]["w"], self.stems[lvl]["b"])

            # fused cls_conv + reg_conv (same input x, same kernel size) -> one conv
            w_cr = jnp.concatenate([self.cls_convs[lvl]["w"],
                                    self.reg_convs[lvl]["w"]], axis=0)
            b_cr = jnp.concatenate([self.cls_convs[lvl]["b"],
                                    self.reg_convs[lvl]["b"]], axis=0)
            feats = conv2d(x, w_cr, b_cr)            # (..., 2h): [:h]=cls_feat, [h:]=reg_feat
            H, W = feats.shape[1], feats.shape[2]

            # fused (reg, obj, cls) 1x1 preds as one block-diagonal matmul.
            # input rows: [cls_feat | reg_feat]; output cols: [reg(4), obj(1), cls(nc)]
            w_pred = jnp.zeros((2 * h, D), jnp.float32)
            w_pred = w_pred.at[h:, 0:4].set(self.reg_preds[lvl]["w"].reshape(4, h).T)
            w_pred = w_pred.at[h:, 4:5].set(self.obj_preds[lvl]["w"].reshape(1, h).T)
            w_pred = w_pred.at[:h, 5:].set(self.cls_preds[lvl]["w"].reshape(nc, h).T)
            b_pred = jnp.concatenate([self.reg_preds[lvl]["b"],
                                      self.obj_preds[lvl]["b"],
                                      self.cls_preds[lvl]["b"]], axis=0)
            x_pred = feats.reshape(B * H * W, 2 * h)
            out2d = fused_matmul_bias_act(x_pred, w_pred, b_pred, act="none")
            level_outs.append(out2d.reshape(B, H * W, D))

            # anchor grid (x, y) row-major over (h, w), and per-anchor stride
            ys, xs = np.meshgrid(np.arange(H), np.arange(W), indexing="ij")
            grid_rows.append(np.stack([xs, ys], -1).reshape(-1, 2).astype(np.float32))
            stride_rows.append(np.full((H * W, 1), float(self.strides[lvl]), np.float32))

        preds = jnp.concatenate(level_outs, axis=1)              # (B, A, D)
        A = preds.shape[1]
        g = np.concatenate(grid_rows, axis=0)                    # (A, 2)
        s = np.concatenate(stride_rows, axis=0)                  # (A, 1)
        g_t = jnp.asarray(np.tile(g, (B, 1)).T)                  # (2, B*A)
        s_t = jnp.asarray(np.tile(s, (B, 1)).T)                  # (1, B*A)
        p_t = preds.reshape(B * A, D).T                          # (D, B*A)
        dec_t = decode_predictions(p_t, g_t, s_t)                # (D, B*A)
        return dec_t.T.reshape(B, A, D)


class YOLOX:
    """Mirror of the PyTorch YOLOX module (eval / detection path)."""

    def __init__(self, backbone=None, head=None):
        self.backbone = backbone
        self.head = head
        self.training = False

    def forward(self, x_nchw, targets=None):
        x_nhwc = jnp.transpose(x_nchw, (0, 2, 3, 1))
        fpn_outs = self.backbone(x_nhwc)
        if self.training:
            # TODO(synk): training loss path (SimOTA assignment + losses) not implemented.
            raise NotImplementedError("training path not implemented")
        outputs = self.head(fpn_outs)
        return outputs

    __call__ = forward


# ----------------------------------------------------------------------------
if __name__ == "__main__":
    key = jax.random.PRNGKey(0)
    k_bb, k_head, k_x = jax.random.split(key, 3)

    NUM_CLASSES = 4
    backbone = TinyBackbone(k_bb, in_ch=3, base=8)
    head = TinyYOLOXHead(k_head, NUM_CLASSES,
                         in_channels=backbone.out_channels,
                         strides=backbone.strides, hidden=16)
    model = YOLOX(backbone=backbone, head=head)

    x = jax.random.normal(k_x, (2, 3, 32, 32), jnp.float32)  # NCHW, like PyTorch

    out = model(x)
    out = jax.block_until_ready(out)

    expected_anchors = (32 // 4) ** 2 + (32 // 8) ** 2 + (32 // 16) ** 2  # 64+16+4
    assert out.shape == (2, expected_anchors, 5 + NUM_CLASSES), out.shape
    assert bool(jnp.all(jnp.isfinite(out)))
    # obj/cls scores are sigmoid outputs -> in (0, 1)
    assert bool(jnp.all((out[..., 4:] > 0.0) & (out[..., 4:] < 1.0)))
    print("KERNEL_OK")
</pallas_src>

<mosaic_0001>
module attributes {stable_mosaic.version = 11 : i64} {
  func.func @_matmul_bias_act_kernel(%arg0: i32, %arg1: i32, %arg2: i32, %arg3: memref<512x128xbf16, #tpu.memory_space<vmem>>, %arg4: memref<128x128xbf16, #tpu.memory_space<vmem>>, %arg5: memref<1x128xf32, #tpu.memory_space<vmem>>, %arg6: memref<512x128xf32, #tpu.memory_space<vmem>>, %arg7: memref<512x128xf32, #tpu.memory_space<vmem>>) attributes {dimension_semantics = [#tpu.dimension_semantics<parallel>, #tpu.dimension_semantics<parallel>, #tpu.dimension_semantics<arbitrary>], iteration_bounds = array<i64: 1, 1, 1>, scalar_prefetch = 0 : i64, scratch_operands = 1 : i64, tpu.core_type = #tpu.core_type<tc>, window_params = [{transform_indices = @transform_0, window_bounds = array<i64: 512, 128>}, {transform_indices = @transform_1, window_bounds = array<i64: 128, 128>}, {transform_indices = @transform_2, window_bounds = array<i64: 1, 128>}, {transform_indices = @transform_3, window_bounds = array<i64: 512, 128>}]} {
    %c0_i32 = arith.constant 0 : i32
    %0 = arith.cmpi eq, %arg2, %c0_i32 : i32
    %1 = arith.extui %0 : i1 to i32
    %c0_i32_0 = arith.constant 0 : i32
    %2 = arith.cmpi ne, %1, %c0_i32_0 : i32
    scf.if %2 {
      %cst_10 = arith.constant 0.000000e+00 : f32
      %12 = vector.broadcast %cst_10 : f32 to vector<512x128xf32>
      %c0_11 = arith.constant 0 : index
      %c0_12 = arith.constant 0 : index
      %13 = vector.load %arg7[%c0_11, %c0_12] : memref<512x128xf32, #tpu.memory_space<vmem>>, vector<512x128xf32>
      tpu.vector_store %arg7[%c0_11, %c0_12], %12 {strides = array<i32>} : memref<512x128xf32, #tpu.memory_space<vmem>>, vector<512x128xf32>,
    } else {
    }
    %c0 = arith.constant 0 : index
    %c0_1 = arith.constant 0 : index
    %3 = vector.load %arg7[%c0, %c0_1] : memref<512x128xf32, #tpu.memory_space<vmem>>, vector<512x128xf32>
    %c0_2 = arith.constant 0 : index
    %c0_3 = arith.constant 0 : index
    %4 = vector.load %arg3[%c0_2, %c0_3] : memref<512x128xbf16, #tpu.memory_space<vmem>>, vector<512x128xbf16>
    %c0_4 = arith.constant 0 : index
    %c0_5 = arith.constant 0 : index
    %5 = vector.load %arg4[%c0_4, %c0_5] : memref<128x128xbf16, #tpu.memory_space<vmem>>, vector<128x128xbf16>
    %cst = arith.constant dense<0.000000e+00> : vector<512x128xf32>
    %6 = tpu.matmul %4, %5, %cst {dimension_numbers = #tpu.dot_dimension_numbers<[1], [0], [0], [1], [0, 0, 1, 1], [], []>} : vector<512x128xbf16>, vector<128x128xbf16>, vector<512x128xf32> -> vector<512x128xf32>
    %7 = arith.addf %3, %6 : vector<512x128xf32>
    %c0_6 = arith.constant 0 : index
    %c0_7 = arith.constant 0 : index
    %8 = vector.load %arg7[%c0_6, %c0_7] : memref<512x128xf32, #tpu.memory_space<vmem>>, vector<512x128xf32>
    tpu.vector_store %arg7[%c0_6, %c0_7], %7 {strides = array<i32>} : memref<512x128xf32, #tpu.memory_space<vmem>>, vector<512x128xf32>,
    %c0_i32_8 = arith.constant 0 : i32
    %9 = arith.cmpi eq, %arg2, %c0_i32_8 : i32
    %10 = arith.extui %9 : i1 to i32
    %c0_i32_9 = arith.constant 0 : i32
    %11 = arith.cmpi ne, %10, %c0_i32_9 : i32
    scf.if %11 {
      %c0_10 = arith.constant 0 : index
      %c0_11 = arith.constant 0 : index
      %12 = vector.load %arg7[%c0_10, %c0_11] : memref<512x128xf32, #tpu.memory_space<vmem>>, vector<512x128xf32>
      %c0_12 = arith.constant 0 : index
      %c0_13 = arith.constant 0 : index
      %13 = vector.load %arg5[%c0_12, %c0_13] : memref<1x128xf32, #tpu.memory_space<vmem>>, vector<1x128xf32>
      %14 = vector.broadcast %13 : vector<1x128xf32> to vector<512x128xf32>
      %15 = arith.addf %12, %14 : vector<512x128xf32>
      %16 = arith.negf %15 : vector<512x128xf32>
      %17 = math.exp %16 : vector<512x128xf32>
      %cst_14 = arith.constant 1.000000e+00 : f32
      %18 = vector.broadcast %cst_14 : f32 to vector<512x128xf32>
      %19 = arith.addf %18, %17 : vector<512x128xf32>
      %20 = arith.divf %18, %19 : vector<512x128xf32>
      %21 = arith.mulf %15, %20 : vector<512x128xf32>
      %c0_15 = arith.constant 0 : index
      %c0_16 = arith.constant 0 : index
      %22 = vector.load %arg6[%c0_15, %c0_16] : memref<512x128xf32, #tpu.memory_space<vmem>>, vector<512x128xf32>
      tpu.vector_store %arg6[%c0_15, %c0_16], %21 {strides = array<i32>} : memref<512x128xf32, #tpu.memory_space<vmem>>, vector<512x128xf32>,
    } else {
    }
    return
  }
  func.func @transform_0(%arg0: i32, %arg1: i32, %arg2: i32) -> (i32, i32) {
    %c0_i32 = arith.constant 0 : i32
    return %arg0, %arg2 : i32, i32
  }
  func.func @transform_1(%arg0: i32, %arg1: i32, %arg2: i32) -> (i32, i32) {
    %c0_i32 = arith.constant 0 : i32
    return %arg2, %arg1 : i32, i32
  }
  func.func @transform_2(%arg0: i32, %arg1: i32, %arg2: i32) -> (i32, i32) {
    %c0_i32 = arith.constant 0 : i32
    %c0_i32_0 = arith.constant 0 : i32
    return %c0_i32, %arg1 : i32, i32
  }
  func.func @transform_3(%arg0: i32, %arg1: i32, %arg2: i32) -> (i32, i32) {
    %c0_i32 = arith.constant 0 : i32
    return %arg0, %arg1 : i32, i32
  }
}

</mosaic_0001>

<llo_original>
// kernel: tpu_custom_call.1
$region0: #{tpu_custom_call.1}
  #allocation0 [shape = 'u32[]', space=smem, size = 0x4, offset = 0x4, fixed_abs, tag = 'smem constant byte address 0x4 - core index']
  #allocation1 [shape = 'u32[144,128]{1,0:T(1,128)}', space=vmem, size = 0x12000, scoped, tag = 'internal scratch']
  #allocation2 [shape = 'f32[512,128]{1,0:T(8,128)}', space=vmem, size = 0x40000, scoped, tag = 'scratch operand']
  %s0 = inlined_call_operand.hbm [shape: bf16[512,128], index: 0, kind: input, shape index: {}]
  %s1 = inlined_call_operand.hbm [shape: bf16[128,128], index: 1, kind: input, shape index: {}]
  %s2 = inlined_call_operand.vmem [shape: f32[1,128], index: 2, kind: input, shape index: {}]
  %s3 = inlined_call_operand.hbm [shape: f32[512,128], index: 3, kind: output, shape index: {}]
  %s4 = sld [smem:[#allocation0]]
  $region38: #{tpu_custom_call.1} parent=0
    _
  %s6 = ssub.s32 1, %s4
  %s7 = scalar_select 0, %s6, %s4
  $region1: #{tpu_custom_call.1} parent=0
    #allocation3 [shape = 'u8[131072]{0}', space=vmem, size = 0x20000, scoped, tag = 'input window, operand 0, single buffered']
    #allocation4 [shape = 's32[1]{0}', space=sflag, size = 0x4, scoped, tag = 'scoped memory for tpu_custom_call.1']
    #allocation5 [shape = 's32[1]{0}', space=sflag, size = 0x4, scoped, tag = 'scoped memory for tpu_custom_call.1']
    #allocation6 [shape = 'u8[32768]{0}', space=vmem, size = 0x8000, scoped, tag = 'input window, operand 1, single buffered']
    #allocation7 [shape = 's32[1]{0}', space=sflag, size = 0x4, scoped, tag = 'scoped memory for tpu_custom_call.1']
    #allocation8 [shape = 'u8[262144]{0}', space=vmem, size = 0x40000, scoped, tag = 'output window, operand 0, single buffered']
    %8 = vsyncpa [#allocation4], 0
    %9 = vsyncpa [#allocation7], 0
    %10 = vsyncpa [#allocation5], 0
    // Predicated region
    $region2: #{tpu_custom_call.1} parent=1 // pred_check
      _
    $region3: #{tpu_custom_call.1} parent=1 // pred_check_branch
      %12 = sbr.rel (0) target = $region5
    $region4: #{tpu_custom_call.1} parent=1 // pred_region
      %s14 = ssub.s32 4096, 4096
      %15 = vsyncadd [#allocation4], %s14
      %s16 = sshll.u32 [#allocation3], 4
      %s17 = int_to_ptr.vmem [resolvable:$true] %s16
      %22 = dma.hbm_to_vmem [thread:$0]  %s0, 4096, %s17, [#allocation4], 64, 64, 4
    $region5: #{tpu_custom_call.1} parent=1 // pred_fallthru
      _
    // Predicated region
    $region6: #{tpu_custom_call.1} parent=1 // pred_check
      _
    $region7: #{tpu_custom_call.1} parent=1 // pred_check_branch
      %24 = sbr.rel (0) target = $region9
    $region8: #{tpu_custom_call.1} parent=1 // pred_region
      %s26 = ssub.s32 1024, 1024
      %27 = vsyncadd [#allocation7], %s26
      %s28 = sshll.u32 [#allocation6], 4
      %s29 = int_to_ptr.vmem [resolvable:$true] %s28
      %34 = dma.hbm_to_vmem [thread:$0]  %s1, 1024, %s29, [#allocation7], 64, 64, 4
    $region9: #{tpu_custom_call.1} parent=1 // pred_fallthru
      _
    // Predicated region
    $region10: #{tpu_custom_call.1} parent=1 // pred_check
      _
    $region11: #{tpu_custom_call.1} parent=1 // pred_check_branch
      %36 = sbr.rel (0) target = $region13
    $region12: #{tpu_custom_call.1} parent=1 // pred_region
      _
    $region13: #{tpu_custom_call.1} parent=1 // pred_fallthru
      _
    // Predicated region
    $region14: #{tpu_custom_call.1} parent=1 // pred_check
      _
    $region15: #{tpu_custom_call.1} parent=1 // pred_check_branch
      %38 = sbr.rel (0) target = $region17
    $region16: #{tpu_custom_call.1} parent=1 // pred_region
      %39 = dma.done [#allocation4], 4096
    $region17: #{tpu_custom_call.1} parent=1 // pred_fallthru
      _
    // Predicated region
    $region18: #{tpu_custom_call.1} parent=1 // pred_check
      _
    $region19: #{tpu_custom_call.1} parent=1 // pred_check_branch
      %41 = sbr.rel (0) target = $region21
    $region20: #{tpu_custom_call.1} parent=1 // pred_region
      %42 = dma.done [#allocation7], 1024
    $region21: #{tpu_custom_call.1} parent=1 // pred_fallthru
      _
    %p44 = scmp.eq.s32.totalorder 0, 0
    // Predicated region
    $region22: #{tpu_custom_call.1} parent=1 // pred_check
      %p45 = pneg %p44
    $region23: #{tpu_custom_call.1} parent=1 // pred_check_branch
      %47 = sbr.rel (%p45) target = $region25
    $region24: #{tpu_custom_call.1} parent=1 // pred_region
      %48 = vst [vmem:[#allocation2] sm:$0xff] 0.0
      %49 = vst [vmem:[#allocation2 + $0x8] sm:$0xff] 0.0
      %50 = vst [vmem:[#allocation2 + $0x10] sm:$0xff] 0.0
      %51 = vst [vmem:[#allocation2 + $0x18] sm:$0xff] 0.0
      %52 = vst [vmem:[#allocation2 + $0x20] sm:$0xff] 0.0
      %53 = vst [vmem:[#allocation2 + $0x28] sm:$0xff] 0.0
      %54 = vst [vmem:[#allocation2 + $0x30] sm:$0xff] 0.0
      %55 = vst [vmem:[#allocation2 + $0x38] sm:$0xff] 0.0
      %56 = vst [vmem:[#allocation2 + $0x40] sm:$0xff] 0.0
      %57 = vst [vmem:[#allocation2 + $0x48] sm:$0xff] 0.0
      %58 = vst [vmem:[#allocation2 + $0x50] sm:$0xff] 0.0
      %59 = vst [vmem:[#allocation2 + $0x58] sm:$0xff] 0.0
      %60 = vst [vmem:[#allocation2 + $0x60] sm:$0xff] 0.0
      %61 = vst [vmem:[#allocation2 + $0x68] sm:$0xff] 0.0
      %62 = vst [vmem:[#allocation2 + $0x70] sm:$0xff] 0.0
      %63 = vst [vmem:[#allocation2 + $0x78] sm:$0xff] 0.0
      %64 = vst [vmem:[#allocation2 + $0x80] sm:$0xff] 0.0
      %65 = vst [vmem:[#allocation2 + $0x88] sm:$0xff] 0.0
      %66 = vst [vmem:[#allocation2 + $0x90] sm:$0xff] 0.0
      %67 = vst [vmem:[#allocation2 + $0x98] sm:$0xff] 0.0
      %68 = vst [vmem:[#allocation2 + $0xa0] sm:$0xff] 0.0
      %69 = vst [vmem:[#allocation2 + $0xa8] sm:$0xff] 0.0
      %70 = vst [vmem:[#allocation2 + $0xb0] sm:$0xff] 0.0
      %71 = vst [vmem:[#allocation2 + $0xb8] sm:$0xff] 0.0
      %72 = vst [vmem:[#allocation2 + $0xc0] sm:$0xff] 0.0
      %73 = vst [vmem:[#allocation2 + $0xc8] sm:$0xff] 0.0
      %74 = vst [vmem:[#allocation2 + $0xd0] sm:$0xff] 0.0
      %75 = vst [vmem:[#allocation2 + $0xd8] sm:$0xff] 0.0
      %76 = vst [vmem:[#allocation2 + $0xe0] sm:$0xff] 0.0
      %77 = vst [vmem:[#allocation2 + $0xe8] sm:$0xff] 0.0
      %78 = vst [vmem:[#allocation2 + $0xf0] sm:$0xff] 0.0
      %79 = vst [vmem:[#allocation2 + $0xf8] sm:$0xff] 0.0
      %80 = vst [vmem:[#allocation2 + $0x100] sm:$0xff] 0.0
      %81 = vst [vmem:[#allocation2 + $0x108] sm:$0xff] 0.0
      %82 = vst [vmem:[#allocation2 + $0x110] sm:$0xff] 0.0
      %83 = vst [vmem:[#allocation2 + $0x118] sm:$0xff] 0.0
      %84 = vst [vmem:[#allocation2 + $0x120] sm:$0xff] 0.0
      %85 = vst [vmem:[#allocation2 + $0x128] sm:$0xff] 0.0
      %86 = vst [vmem:[#allocation2 + $0x130] sm:$0xff] 0.0
      %87 = vst [vmem:[#allocation2 + $0x138] sm:$0xff] 0.0
      %88 = vst [vmem:[#allocation2 + $0x140] sm:$0xff] 0.0
      %89 = vst [vmem:[#allocation2 + $0x148] sm:$0xff] 0.0
      %90 = vst [vmem:[#allocation2 + $0x150] sm:$0xff] 0.0
      %91 = vst [vmem:[#allocation2 + $0x158] sm:$0xff] 0.0
      %92 = vst [vmem:[#allocation2 + $0x160] sm:$0xff] 0.0
      %93 = vst [vmem:[#allocation2 + $0x168] sm:$0xff] 0.0
      %94 = vst [vmem:[#allocation2 + $0x170] sm:$0xff] 0.0
      %95 = vst [vmem:[#allocation2 + $0x178] sm:$0xff] 0.0
      %96 = vst [vmem:[#allocation2 + $0x180] sm:$0xff] 0.0
      %97 = vst [vmem:[#allocation2 + $0x188] sm:$0xff] 0.0
      %98 = vst [vmem:[#allocation2 + $0x190] sm:$0xff] 0.0
      %99 = vst [vmem:[#allocation2 + $0x198] sm:$0xff] 0.0
      %100 = vst [vmem:[#allocation2 + $0x1a0] sm:$0xff] 0.0
      %101 = vst [vmem:[#allocation2 + $0x1a8] sm:$0xff] 0.0
      %102 = vst [vmem:[#allocation2 + $0x1b0] sm:$0xff] 0.0
      %103 = vst [vmem:[#allocation2 + $0x1b8] sm:$0xff] 0.0
      %104 = vst [vmem:[#allocation2 + $0x1c0] sm:$0xff] 0.0
      %105 = vst [vmem:[#allocation2 + $0x1c8] sm:$0xff] 0.0
      %106 = vst [vmem:[#allocation2 + $0x1d0] sm:$0xff] 0.0
      %107 = vst [vmem:[#allocation2 + $0x1d8] sm:$0xff] 0.0
      %108 = vst [vmem:[#allocation2 + $0x1e0] sm:$0xff] 0.0
      %109 = vst [vmem:[#allocation2 + $0x1e8] sm:$0xff] 0.0
      %110 = vst [vmem:[#allocation2 + $0x1f0] sm:$0xff] 0.0
      %111 = vst [vmem:[#allocation2 + $0x1f8] sm:$0xff] 0.0
    $region25: #{tpu_custom_call.1} parent=1 // pred_fallthru
      _
    %v112 = vld [vmem:[#allocation2] sm:$0xff]
    %v113 = vld [vmem:[#allocation2 + $0x8] sm:$0xff]
    %v114 = vld [vmem:[#allocation2 + $0x10] sm:$0xff]
    %v115 = vld [vmem:[#allocation2 + $0x18] sm:$0xff]
    %v116 = vld [vmem:[#allocation2 + $0x20] sm:$0xff]
    %v117 = vld [vmem:[#allocation2 + $0x28] sm:$0xff]
    %v118 = vld [vmem:[#allocation2 + $0x30] sm:$0xff]
    %v119 = vld [vmem:[#allocation2 + $0x38] sm:$0xff]
    %v120 = vld [vmem:[#allocation2 + $0x40] sm:$0xff]
    %v121 = vld [vmem:[#allocation2 + $0x48] sm:$0xff]
    %v122 = vld [vmem:[#allocation2 + $0x50] sm:$0xff]
    %v123 = vld [vmem:[#allocation2 + $0x58] sm:$0xff]
    %v124 = vld [vmem:[#allocation2 + $0x60] sm:$0xff]
    %v125 = vld [vmem:[#allocation2 + $0x68] sm:$0xff]
    %v126 = vld [vmem:[#allocation2 + $0x70] sm:$0xff]
    %v127 = vld [vmem:[#allocation2 + $0x78] sm:$0xff]
    %v128 = vld [vmem:[#allocation2 + $0x80] sm:$0xff]
    %v129 = vld [vmem:[#allocation2 + $0x88] sm:$0xff]
    %v130 = vld [vmem:[#allocation2 + $0x90] sm:$0xff]
    %v131 = vld [vmem:[#allocation2 + $0x98] sm:$0xff]
    %v132 = vld [vmem:[#allocation2 + $0xa0] sm:$0xff]
    %v133 = vld [vmem:[#allocation2 + $0xa8] sm:$0xff]
    %v134 = vld [vmem:[#allocation2 + $0xb0] sm:$0xff]
    %v135 = vld [vmem:[#allocation2 + $0xb8] sm:$0xff]
    %v136 = vld [vmem:[#allocation2 + $0xc0] sm:$0xff]
    %v137 = vld [vmem:[#allocation2 + $0xc8] sm:$0xff]
    %v138 = vld [vmem:[#allocation2 + $0xd0] sm:$0xff]
    %v139 = vld [vmem:[#allocation2 + $0xd8] sm:$0xff]
    %v140 = vld [vmem:[#allocation2 + $0xe0] sm:$0xff]
    %v141 = vld [vmem:[#allocation2 + $0xe8] sm:$0xff]
    %v142 = vld [vmem:[#allocation2 + $0xf0] sm:$0xff]
    %v143 = vld [vmem:[#allocation2 + $0xf8] sm:$0xff]
    %v144 = vld [vmem:[#allocation2 + $0x100] sm:$0xff]
    %v145 = vld [vmem:[#allocation2 + $0x108] sm:$0xff]
    %v146 = vld [vmem:[#allocation2 + $0x110] sm:$0xff]
    %v147 = vld [vmem:[#allocation2 + $0x118] sm:$0xff]
    %v148 = vld [vmem:[#allocation2 + $0x120] sm:$0xff]
    %v149 = vld [vmem:[#allocation2 + $0x128] sm:$0xff]
    %v150 = vld [vmem:[#allocation2 + $0x130] sm:$0xff]
    %v151 = vld [vmem:[#allocation2 + $0x138] sm:$0xff]
    %v152 = vld [vmem:[#allocation2 + $0x140] sm:$0xff]
    %v153 = vld [vmem:[#allocation2 + $0x148] sm:$0xff]
    %v154 = vld [vmem:[#allocation2 + $0x150] sm:$0xff]
    %v155 = vld [vmem:[#allocation2 + $0x158] sm:$0xff]
    %v156 = vld [vmem:[#allocation2 + $0x160] sm:$0xff]
    %v157 = vld [vmem:[#allocation2 + $0x168] sm:$0xff]
    %v158 = vld [vmem:[#allocation2 + $0x170] sm:$0xff]
    %v159 = vld [vmem:[#allocation2 + $0x178] sm:$0xff]
    %v160 = vld [vmem:[#allocation2 + $0x180] sm:$0xff]
    %v161 = vld [vmem:[#allocation2 + $0x188] sm:$0xff]
    %v162 = vld [vmem:[#allocation2 + $0x190] sm:$0xff]
    %v163 = vld [vmem:[#allocation2 + $0x198] sm:$0xff]
    %v164 = vld [vmem:[#allocation2 + $0x1a0] sm:$0xff]
    %v165 = vld [vmem:[#allocation2 + $0x1a8] sm:$0xff]
    %v166 = vld [vmem:[#allocation2 + $0x1b0] sm:$0xff]
    %v167 = vld [vmem:[#allocation2 + $0x1b8] sm:$0xff]
    %v168 = vld [vmem:[#allocation2 + $0x1c0] sm:$0xff]
    %v169 = vld [vmem:[#allocation2 + $0x1c8] sm:$0xff]
    %v170 = vld [vmem:[#allocation2 + $0x1d0] sm:$0xff]
    %v171 = vld [vmem:[#allocation2 + $0x1d8] sm:$0xff]
    %v172 = vld [vmem:[#allocation2 + $0x1e0] sm:$0xff]
    %v173 = vld [vmem:[#allocation2 + $0x1e8] sm:$0xff]
    %v174 = vld [vmem:[#allocation2 + $0x1f0] sm:$0xff]
    %v175 = vld [vmem:[#allocation2 + $0x1f8] sm:$0xff]
    %v176 = vld [vmem:[#allocation3] sm:$0xf]
    %v177 = vld [vmem:[#allocation3 + $0x4] sm:$0xf]
    %v178 = vld [vmem:[#allocation3 + $0x8] sm:$0xf]
    %v179 = vld [vmem:[#allocation3 + $0xc] sm:$0xf]
    %v180 = vld [vmem:[#allocation3 + $0x10] sm:$0xf]
    %v181 = vld [vmem:[#allocation3 + $0x14] sm:$0xf]
    %v182 = vld [vmem:[#allocation3 + $0x18] sm:$0xf]
    %v183 = vld [vmem:[#allocation3 + $0x1c] sm:$0xf]
    %v184 = vld [vmem:[#allocation3 + $0x20] sm:$0xf]
    %v185 = vld [vmem:[#allocation3 + $0x24] sm:$0xf]
    %v186 = vld [vmem:[#allocation3 + $0x28] sm:$0xf]
    %v187 = vld [vmem:[#allocation3 + $0x2c] sm:$0xf]
    %v188 = vld [vmem:[#allocation3 + $0x30] sm:$0xf]
    %v189 = vld [vmem:[#allocation3 + $0x34] sm:$0xf]
    %v190 = vld [vmem:[#allocation3 + $0x38] sm:$0xf]
    %v191 = vld [vmem:[#allocation3 + $0x3c] sm:$0xf]
    %v192 = vld [vmem:[#allocation3 + $0x40] sm:$0xf]
    %v193 = vld [vmem:[#allocation3 + $0x44] sm:$0xf]
    %v194 = vld [vmem:[#allocation3 + $0x48] sm:$0xf]
    %v195 = vld [vmem:[#allocation3 + $0x4c] sm:$0xf]
    %v196 = vld [vmem:[#allocation3 + $0x50] sm:$0xf]
    %v197 = vld [vmem:[#allocation3 + $0x54] sm:$0xf]
    %v198 = vld [vmem:[#allocation3 + $0x58] sm:$0xf]
    %v199 = vld [vmem:[#allocation3 + $0x5c] sm:$0xf]
    %v200 = vld [vmem:[#allocation3 + $0x60] sm:$0xf]
    %v201 = vld [vmem:[#allocation3 + $0x64] sm:$0xf]
    %v202 = vld [vmem:[#allocation3 + $0x68] sm:$0xf]
    %v203 = vld [vmem:[#allocation3 + $0x6c] sm:$0xf]
    %v204 = vld [vmem:[#allocation3 + $0x70] sm:$0xf]
    %v205 = vld [vmem:[#allocation3 + $0x74] sm:$0xf]
    %v206 = vld [vmem:[#allocation3 + $0x78] sm:$0xf]
    %v207 = vld [vmem:[#allocation3 + $0x7c] sm:$0xf]
    %v208 = vld [vmem:[#allocation3 + $0x80] sm:$0xf]
    %v209 = vld [vmem:[#allocation3 + $0x84] sm:$0xf]
    %v210 = vld [vmem:[#allocation3 + $0x88] sm:$0xf]
    %v211 = vld [vmem:[#allocation3 + $0x8c] sm:$0xf]
    %v212 = vld [vmem:[#allocation3 + $0x90] sm:$0xf]
    %v213 = vld [vmem:[#allocation3 + $0x94] sm:$0xf]
    %v214 = vld [vmem:[#allocation3 + $0x98] sm:$0xf]
    %v215 = vld [vmem:[#allocation3 + $0x9c] sm:$0xf]
    %v216 = vld [vmem:[#allocation3 + $0xa0] sm:$0xf]
    %v217 = vld [vmem:[#allocation3 + $0xa4] sm:$0xf]
    %v218 = vld [vmem:[#allocation3 + $0xa8] sm:$0xf]
    %v219 = vld [vmem:[#allocation3 + $0xac] sm:$0xf]
    %v220 = vld [vmem:[#allocation3 + $0xb0] sm:$0xf]
    %v221 = vld [vmem:[#allocation3 + $0xb4] sm:$0xf]
    %v222 = vld [vmem:[#allocation3 + $0xb8] sm:$0xf]
    %v223 = vld [vmem:[#allocation3 + $0xbc] sm:$0xf]
    %v224 = vld [vmem:[#allocation3 + $0xc0] sm:$0xf]
    %v225 = vld [vmem:[#allocation3 + $0xc4] sm:$0xf]
    %v226 = vld [vmem:[#allocation3 + $0xc8] sm:$0xf]
    %v227 = vld [vmem:[#allocation3 + $0xcc] sm:$0xf]
    %v228 = vld [vmem:[#allocation3 + $0xd0] sm:$0xf]
    %v229 = vld [vmem:[#allocation3 + $0xd4] sm:$0xf]
    %v230 = vld [vmem:[#allocation3 + $0xd8] sm:$0xf]
    %v231 = vld [vmem:[#allocation3 + $0xdc] sm:$0xf]
    %v232 = vld [vmem:[#allocation3 + $0xe0] sm:$0xf]
    %v233 = vld [vmem:[#allocation3 + $0xe4] sm:$0xf]
    %v234 = vld [vmem:[#allocation3 + $0xe8] sm:$0xf]
    %v235 = vld [vmem:[#allocation3 + $0xec] sm:$0xf]
    %v236 = vld [vmem:[#allocation3 + $0xf0] sm:$0xf]
    %v237 = vld [vmem:[#allocation3 + $0xf4] sm:$0xf]
    %v238 = vld [vmem:[#allocation3 + $0xf8] sm:$0xf]
    %v239 = vld [vmem:[#allocation3 + $0xfc] sm:$0xf]
    %v240 = vld [vmem:[#allocation6] sm:$0xf]
    %v241 = vld [vmem:[#allocation6 + $0x4] sm:$0xf]
    %v242 = vld [vmem:[#allocation6 + $0x8] sm:$0xf]
    %v243 = vld [vmem:[#allocation6 + $0xc] sm:$0xf]
    %v244 = vld [vmem:[#allocation6 + $0x10] sm:$0xf]
    %v245 = vld [vmem:[#allocation6 + $0x14] sm:$0xf]
    %v246 = vld [vmem:[#allocation6 + $0x18] sm:$0xf]
    %v247 = vld [vmem:[#allocation6 + $0x1c] sm:$0xf]
    %v248 = vld [vmem:[#allocation6 + $0x20] sm:$0xf]
    %v249 = vld [vmem:[#allocation6 + $0x24] sm:$0xf]
    %v250 = vld [vmem:[#allocation6 + $0x28] sm:$0xf]
    %v251 = vld [vmem:[#allocation6 + $0x2c] sm:$0xf]
    %v252 = vld [vmem:[#allocation6 + $0x30] sm:$0xf]
    %v253 = vld [vmem:[#allocation6 + $0x34] sm:$0xf]
    %v254 = vld [vmem:[#allocation6 + $0x38] sm:$0xf]
    %v255 = vld [vmem:[#allocation6 + $0x3c] sm:$0xf]
    %v320 = vunpack.c.l.b16 %v176
    %v321 = vunpack.c.l.b16 %v177
    %v322 = vunpack.c.l.b16 %v178
    %v323 = vunpack.c.l.b16 %v179
    %v324 = vunpack.c.l.b16 %v180
    %v325 = vunpack.c.l.b16 %v181
    %v326 = vunpack.c.l.b16 %v182
    %v327 = vunpack.c.l.b16 %v183
    %v328 = vunpack.c.l.b16 %v184
    %v329 = vunpack.c.l.b16 %v185
    %v330 = vunpack.c.l.b16 %v186
    %v331 = vunpack.c.l.b16 %v187
    %v332 = vunpack.c.l.b16 %v188
    %v333 = vunpack.c.l.b16 %v189
    %v334 = vunpack.c.l.b16 %v190
    %v335 = vunpack.c.l.b16 %v191
    %v336 = vunpack.c.l.b16 %v192
    %v337 = vunpack.c.l.b16 %v193
    %v338 = vunpack.c.l.b16 %v194
    %v339 = vunpack.c.l.b16 %v195
    %v340 = vunpack.c.l.b16 %v196
    %v341 = vunpack.c.l.b16 %v197
    %v342 = vunpack.c.l.b16 %v198
    %v343 = vunpack.c.l.b16 %v199
    %v344 = vunpack.c.l.b16 %v200
    %v345 = vunpack.c.l.b16 %v201
    %v346 = vunpack.c.l.b16 %v202
    %v347 = vunpack.c.l.b16 %v203
    %v348 = vunpack.c.l.b16 %v204
    %v349 = vunpack.c.l.b16 %v205
    %v350 = vunpack.c.l.b16 %v206
    %v351 = vunpack.c.l.b16 %v207
    %v352 = vunpack.c.l.b16 %v208
    %v353 = vunpack.c.l.b16 %v209
    %v354 = vunpack.c.l.b16 %v210
    %v355 = vunpack.c.l.b16 %v211
    %v356 = vunpack.c.l.b16 %v212
    %v357 = vunpack.c.l.b16 %v213
    %v358 = vunpack.c.l.b16 %v214
    %v359 = vunpack.c.l.b16 %v215
    %v360 = vunpack.c.l.b16 %v216
    %v361 = vunpack.c.l.b16 %v217
    %v362 = vunpack.c.l.b16 %v218
    %v363 = vunpack.c.l.b16 %v219
    %v364 = vunpack.c.l.b16 %v220
    %v365 = vunpack.c.l.b16 %v221
    %v366 = vunpack.c.l.b16 %v222
    %v367 = vunpack.c.l.b16 %v223
    %v368 = vunpack.c.l.b16 %v224
    %v369 = vunpack.c.l.b16 %v225
    %v370 = vunpack.c.l.b16 %v226
    %v371 = vunpack.c.l.b16 %v227
    %v372 = vunpack.c.l.b16 %v228
    %v373 = vunpack.c.l.b16 %v229
    %v374 = vunpack.c.l.b16 %v230
    %v375 = vunpack.c.l.b16 %v231
    %v376 = vunpack.c.l.b16 %v232
    %v377 = vunpack.c.l.b16 %v233
    %v378 = vunpack.c.l.b16 %v234
    %v379 = vunpack.c.l.b16 %v235
    %v380 = vunpack.c.l.b16 %v236
    %v381 = vunpack.c.l.b16 %v237
    %v382 = vunpack.c.l.b16 %v238
    %v383 = vunpack.c.l.b16 %v239
    %v384 = vpack.c.b16 %v321, %v320
    %v385 = vpack.c.b16 %v323, %v322
    %v386 = vpack.c.b16 %v325, %v324
    %v387 = vpack.c.b16 %v327, %v326
    %v388 = vpack.c.b16 %v329, %v328
    %v389 = vpack.c.b16 %v331, %v330
    %v390 = vpack.c.b16 %v333, %v332
    %v391 = vpack.c.b16 %v335, %v334
    %v392 = vpack.c.b16 %v337, %v336
    %v393 = vpack.c.b16 %v339, %v338
    %v394 = vpack.c.b16 %v341, %v340
    %v395 = vpack.c.b16 %v343, %v342
    %v396 = vpack.c.b16 %v345, %v344
    %v397 = vpack.c.b16 %v347, %v346
    %v398 = vpack.c.b16 %v349, %v348
    %v399 = vpack.c.b16 %v351, %v350
    %v400 = vpack.c.b16 %v353, %v352
    %v401 = vpack.c.b16 %v355, %v354
    %v402 = vpack.c.b16 %v357, %v356
    %v403 = vpack.c.b16 %v359, %v358
    %v404 = vpack.c.b16 %v361, %v360
    %v405 = vpack.c.b16 %v363, %v362
    %v406 = vpack.c.b16 %v365, %v364
    %v407 = vpack.c.b16 %v367, %v366
    %v408 = vpack.c.b16 %v369, %v368
    %v409 = vpack.c.b16 %v371, %v370
    %v410 = vpack.c.b16 %v373, %v372
    %v411 = vpack.c.b16 %v375, %v374
    %v412 = vpack.c.b16 %v377, %v376
    %v413 = vpack.c.b16 %v379, %v378
    %v414 = vpack.c.b16 %v381, %v380
    %v415 = vpack.c.b16 %v383, %v382
    %v464 = vunpack.c.l.b16 %v240
    %v465 = vunpack.c.l.b16 %v241
    %v466 = vunpack.c.l.b16 %v242
    %v467 = vunpack.c.l.b16 %v243
    %v468 = vunpack.c.l.b16 %v244
    %v469 = vunpack.c.l.b16 %v245
    %v470 = vunpack.c.l.b16 %v246
    %v471 = vunpack.c.l.b16 %v247
    %v472 = vunpack.c.l.b16 %v248
    %v473 = vunpack.c.l.b16 %v249
    %v474 = vunpack.c.l.b16 %v250
    %v475 = vunpack.c.l.b16 %v251
    %v476 = vunpack.c.l.b16 %v252
    %v477 = vunpack.c.l.b16 %v253
    %v478 = vunpack.c.l.b16 %v254
    %v479 = vunpack.c.l.b16 %v255
    %v480 = vpack.c.b16 %v465, %v464
    %v481 = vpack.c.b16 %v467, %v466
    %v482 = vpack.c.b16 %v469, %v468
    %v483 = vpack.c.b16 %v471, %v470
    %v484 = vpack.c.b16 %v473, %v472
    %v485 = vpack.c.b16 %v475, %v474
    %v486 = vpack.c.b16 %v477, %v476
    %v487 = vpack.c.b16 %v479, %v478
    %496 = vmatprep.subr.bf16.mxu0 0
    %497 = vmatpush1.bf16.msra.mxu0 %v480
    %498 = vmatprep.subr.bf16.mxu0 0
    %499 = vmatpush1.bf16.msra.mxu0 %v481
    %500 = vmatprep.subr.bf16.mxu0 0
    %501 = vmatpush1.bf16.msra.mxu0 %v482
    %502 = vmatprep.subr.bf16.mxu0 0
    %503 = vmatpush1.bf16.msra.mxu0 %v483
    %504 = vmatprep.subr.bf16.mxu0 0
    %505 = vmatpush1.bf16.msra.mxu0 %v484
    %506 = vmatprep.subr.bf16.mxu0 0
    %507 = vmatpush1.bf16.msra.mxu0 %v485
    %508 = vmatprep.subr.bf16.mxu0 0
    %509 = vmatpush1.bf16.msra.mxu0 %v486
    %510 = vmatprep.subr.bf16.mxu0 0
    %511 = vmatpush1.bf16.msra.mxu0 %v487
    %512 = vmatprep.subr.bf16.mxu0 0
    %513 = vmatpush1.bf16.msra.mxu0 0
    %514 = vmatprep.subr.bf16.mxu0 0
    %515 = vmatpush1.bf16.msra.mxu0 0
    %516 = vmatprep.subr.bf16.mxu0 0
    %517 = vmatpush1.bf16.msra.mxu0 0
    %518 = vmatprep.subr.bf16.mxu0 0
    %519 = vmatpush1.bf16.msra.mxu0 0
    %520 = vmatprep.subr.bf16.mxu0 0
    %521 = vmatpush1.bf16.msra.mxu0 0
    %522 = vmatprep.subr.bf16.mxu0 0
    %523 = vmatpush1.bf16.msra.mxu0 0
    %524 = vmatprep.subr.bf16.mxu0 0
    %525 = vmatpush1.bf16.msra.mxu0 0
    %526 = vmatprep.subr.bf16.mxu0 0
    %527 = vmatpush1.bf16.msra.mxu0 0
    %528 = vmatprep.mubr.bf16.mxu0 0
    %529 = vmatmul.mubr.bf16.gmra.mrb[0].mxu0 %v384
    %v530 = vpop.f32.mrb[0].mxu0
    %v531 = vadd.f32 0.0, %v530
    %v532 = vpop.f32.mrb[0].mxu0
    %v533 = vpop.f32.mrb[0].mxu0
    %v534 = vadd.f32 0.0, %v533
    %v535 = vpop.f32.mrb[0].mxu0
    %536 = vmatprep.mubr.bf16.mxu0 0
    %537 = vmatmul.mubr.bf16.gmra.mrb[0].mxu0 %v385
    %v538 = vpop.f32.mrb[0].mxu0
    %v539 = vadd.f32 0.0, %v538
    %v540 = vpop.f32.mrb[0].mxu0
    %v541 = vpop.f32.mrb[0].mxu0
    %v542 = vadd.f32 0.0, %v541
    %v543 = vpop.f32.mrb[0].mxu0
    %544 = vmatprep.mubr.bf16.mxu0 0
    %545 = vmatmul.mubr.bf16.gmra.mrb[0].mxu0 %v386
    %v546 = vpop.f32.mrb[0].mxu0
    %v547 = vadd.f32 0.0, %v546
    %v548 = vpop.f32.mrb[0].mxu0
    %v549 = vpop.f32.mrb[0].mxu0
    %v550 = vadd.f32 0.0, %v549
    %v551 = vpop.f32.mrb[0].mxu0
    %552 = vmatprep.mubr.bf16.mxu0 0
    %553 = vmatmul.mubr.bf16.gmra.mrb[0].mxu0 %v387
    %v554 = vpop.f32.mrb[0].mxu0
    %v555 = vadd.f32 0.0, %v554
    %v556 = vpop.f32.mrb[0].mxu0
    %v557 = vpop.f32.mrb[0].mxu0
    %v558 = vadd.f32 0.0, %v557
    %v559 = vpop.f32.mrb[0].mxu0
    %560 = vmatprep.mubr.bf16.mxu0 0
    %561 = vmatmul.mubr.bf16.gmra.mrb[0].mxu0 %v388
    %v562 = vpop.f32.mrb[0].mxu0
    %v563 = vadd.f32 0.0, %v562
    %v564 = vpop.f32.mrb[0].mxu0
    %v565 = vpop.f32.mrb[0].mxu0
    %v566 = vadd.f32 0.0, %v565
    %v567 = vpop.f32.mrb[0].mxu0
    %568 = vmatprep.mubr.bf16.mxu0 0
    %569 = vmatmul.mubr.bf16.gmra.mrb[0].mxu0 %v389
    %v570 = vpop.f32.mrb[0].mxu0
    %v571 = vadd.f32 0.0, %v570
    %v572 = vpop.f32.mrb[0].mxu0
    %v573 = vpop.f32.mrb[0].mxu0
    %v574 = vadd.f32 0.0, %v573
    %v575 = vpop.f32.mrb[0].mxu0
    %576 = vmatprep.mubr.bf16.mxu0 0
    %577 = vmatmul.mubr.bf16.gmra.mrb[0].mxu0 %v390
    %v578 = vpop.f32.mrb[0].mxu0
    %v579 = vadd.f32 0.0, %v578
    %v580 = vpop.f32.mrb[0].mxu0
    %v581 = vpop.f32.mrb[0].mxu0
    %v582 = vadd.f32 0.0, %v581
    %v583 = vpop.f32.mrb[0].mxu0
    %584 = vmatprep.mubr.bf16.mxu0 0
    %585 = vmatmul.mubr.bf16.gmra.mrb[0].mxu0 %v391
    %v586 = vpop.f32.mrb[0].mxu0
    %v587 = vadd.f32 0.0, %v586
    %v588 = vpop.f32.mrb[0].mxu0
    %v589 = vpop.f32.mrb[0].mxu0
    %v590 = vadd.f32 0.0, %v589
    %v591 = vpop.f32.mrb[0].mxu0
    %592 = vmatprep.mubr.bf16.mxu0 0
    %593 = vmatmul.mubr.bf16.gmra.mrb[0].mxu0 %v392
    %v594 = vpop.f32.mrb[0].mxu0
    %v595 = vadd.f32 0.0, %v594
    %v596 = vpop.f32.mrb[0].mxu0
    %v597 = vpop.f32.mrb[0].mxu0
    %v598 = vadd.f32 0.0, %v597
    %v599 = vpop.f32.mrb[0].mxu0
    %600 = vmatprep.mubr.bf16.mxu0 0
    %601 = vmatmul.mubr.bf16.gmra.mrb[0].mxu0 %v393
    %v602 = vpop.f32.mrb[0].mxu0
    %v603 = vadd.f32 0.0, %v602
    %v604 = vpop.f32.mrb[0].mxu0
    %v605 = vpop.f32.mrb[0].mxu0
    %v606 = vadd.f32 0.0, %v605
    %v607 = vpop.f32.mrb[0].mxu0
    %608 = vmatprep.mubr.bf16.mxu0 0
    %609 = vmatmul.mubr.bf16.gmra.mrb[0].mxu0 %v394
    %v610 = vpop.f32.mrb[0].mxu0
    %v611 = vadd.f32 0.0, %v610
    %v612 = vpop.f32.mrb[0].mxu0
    %v613 = vpop.f32.mrb[0].mxu0
    %v614 = vadd.f32 0.0, %v613
    %v615 = vpop.f32.mrb[0].mxu0
    %616 = vmatprep.mubr.bf16.mxu0 0
    %617 = vmatmul.mubr.bf16.gmra.mrb[0].mxu0 %v395
    %v618 = vpop.f32.mrb[0].mxu0
    %v619 = vadd.f32 0.0, %v618
    %v620 = vpop.f32.mrb[0].mxu0
    %v621 = vpop.f32.mrb[0].mxu0
    %v622 = vadd.f32 0.0, %v621
    %v623 = vpop.f32.mrb[0].mxu0
    %624 = vmatprep.mubr.bf16.mxu0 0
    %625 = vmatmul.mubr.bf16.gmra.mrb[0].mxu0 %v396
    %v626 = vpop.f32.mrb[0].mxu0
    %v627 = vadd.f32 0.0, %v626
    %v628 = vpop.f32.mrb[0].mxu0
    %v629 = vpop.f32.mrb[0].mxu0
    %v630 = vadd.f32 0.0, %v629
    %v631 = vpop.f32.mrb[0].mxu0
    %632 = vmatprep.mubr.bf16.mxu0 0
    %633 = vmatmul.mubr.bf16.gmra.mrb[0].mxu0 %v397
    %v634 = vpop.f32.mrb[0].mxu0
    %v635 = vadd.f32 0.0, %v634
    %v636 = vpop.f32.mrb[0].mxu0
    %v637 = vpop.f32.mrb[0].mxu0
    %v638 = vadd.f32 0.0, %v637
    %v639 = vpop.f32.mrb[0].mxu0
    %640 = vmatprep.mubr.bf16.mxu0 0
    %641 = vmatmul.mubr.bf16.gmra.mrb[0].mxu0 %v398
    %v642 = vpop.f32.mrb[0].mxu0
    %v643 = vadd.f32 0.0, %v642
    %v644 = vpop.f32.mrb[0].mxu0
    %v645 = vpop.f32.mrb[0].mxu0
    %v646 = vadd.f32 0.0, %v645
    %v647 = vpop.f32.mrb[0].mxu0
    %648 = vmatprep.mubr.bf16.mxu0 0
    %649 = vmatmul.mubr.bf16.gmra.mrb[0].mxu0 %v399
    %v650 = vpop.f32.mrb[0].mxu0
    %v651 = vadd.f32 0.0, %v650
    %v652 = vpop.f32.mrb[0].mxu0
    %v653 = vpop.f32.mrb[0].mxu0
    %v654 = vadd.f32 0.0, %v653
    %v655 = vpop.f32.mrb[0].mxu0
    %656 = vmatprep.mubr.bf16.mxu0 0
    %657 = vmatmul.mubr.bf16.gmra.mrb[0].mxu0 %v400
    %v658 = vpop.f32.mrb[0].mxu0
    %v659 = vadd.f32 0.0, %v658
    %v660 = vpop.f32.mrb[0].mxu0
    %v661 = vpop.f32.mrb[0].mxu0
    %v662 = vadd.f32 0.0, %v661
    %v663 = vpop.f32.mrb[0].mxu0
    %664 = vmatprep.mubr.bf16.mxu0 0
    %665 = vmatmul.mubr.bf16.gmra.mrb[0].mxu0 %v401
    %v666 = vpop.f32.mrb[0].mxu0
    %v667 = vadd.f32 0.0, %v666
    %v668 = vpop.f32.mrb[0].mxu0
    %v669 = vpop.f32.mrb[0].mxu0
    %v670 = vadd.f32 0.0, %v669
    %v671 = vpop.f32.mrb[0].mxu0
    %672 = vmatprep.mubr.bf16.mxu0 0
    %673 = vmatmul.mubr.bf16.gmra.mrb[0].mxu0 %v402
    %v674 = vpop.f32.mrb[0].mxu0
    %v675 = vadd.f32 0.0, %v674
    %v676 = vpop.f32.mrb[0].mxu0
    %v677 = vpop.f32.mrb[0].mxu0
    %v678 = vadd.f32 0.0, %v677
    %v679 = vpop.f32.mrb[0].mxu0
    %680 = vmatprep.mubr.bf16.mxu0 0
    %681 = vmatmul.mubr.bf16.gmra.mrb[0].mxu0 %v403
    %v682 = vpop.f32.mrb[0].mxu0
    %v683 = vadd.f32 0.0, %v682
    %v684 = vpop.f32.mrb[0].mxu0
    %v685 = vpop.f32.mrb[0].mxu0
    %v686 = vadd.f32 0.0, %v685
    %v687 = vpop.f32.mrb[0].mxu0
    %688 = vmatprep.mubr.bf16.mxu0 0
    %689 = vmatmul.mubr.bf16.gmra.mrb[0].mxu0 %v404
    %v690 = vpop.f32.mrb[0].mxu0
    %v691 = vadd.f32 0.0, %v690
    %v692 = vpop.f32.mrb[0].mxu0
    %v693 = vpop.f32.mrb[0].mxu0
    %v694 = vadd.f32 0.0, %v693
    %v695 = vpop.f32.mrb[0].mxu0
    %696 = vmatprep.mubr.bf16.mxu0 0
    %697 = vmatmul.mubr.bf16.gmra.mrb[0].mxu0 %v405
    %v698 = vpop.f32.mrb[0].mxu0
    %v699 = vadd.f32 0.0, %v698
    %v700 = vpop.f32.mrb[0].mxu0
    %v701 = vpop.f32.mrb[0].mxu0
    %v702 = vadd.f32 0.0, %v701
    %v703 = vpop.f32.mrb[0].mxu0
    %704 = vmatprep.mubr.bf16.mxu0 0
    %705 = vmatmul.mubr.bf16.gmra.mrb[0].mxu0 %v406
    %v706 = vpop.f32.mrb[0].mxu0
    %v707 = vadd.f32 0.0, %v706
    %v708 = vpop.f32.mrb[0].mxu0
    %v709 = vpop.f32.mrb[0].mxu0
    %v710 = vadd.f32 0.0, %v709
    %v711 = vpop.f32.mrb[0].mxu0
    %712 = vmatprep.mubr.bf16.mxu0 0
    %713 = vmatmul.mubr.bf16.gmra.mrb[0].mxu0 %v407
    %v714 = vpop.f32.mrb[0].mxu0
    %v715 = vadd.f32 0.0, %v714
    %v716 = vpop.f32.mrb[0].mxu0
    %v717 = vpop.f32.mrb[0].mxu0
    %v718 = vadd.f32 0.0, %v717
    %v719 = vpop.f32.mrb[0].mxu0
    %720 = vmatprep.mubr.bf16.mxu0 0
    %721 = vmatmul.mubr.bf16.gmra.mrb[0].mxu0 %v408
    %v722 = vpop.f32.mrb[0].mxu0
    %v723 = vadd.f32 0.0, %v722
    %v724 = vpop.f32.mrb[0].mxu0
    %v725 = vpop.f32.mrb[0].mxu0
    %v726 = vadd.f32 0.0, %v725
    %v727 = vpop.f32.mrb[0].mxu0
    %728 = vmatprep.mubr.bf16.mxu0 0
    %729 = vmatmul.mubr.bf16.gmra.mrb[0].mxu0 %v409
    %v730 = vpop.f32.mrb[0].mxu0
    %v731 = vadd.f32 0.0, %v730
    %v732 = vpop.f32.mrb[0].mxu0
    %v733 = vpop.f32.mrb[0].mxu0
    %v734 = vadd.f32 0.0, %v733
    %v735 = vpop.f32.mrb[0].mxu0
    %736 = vmatprep.mubr.bf16.mxu0 0
    %737 = vmatmul.mubr.bf16.gmra.mrb[0].mxu0 %v410
    %v738 = vpop.f32.mrb[0].mxu0
    %v739 = vadd.f32 0.0, %v738
    %v740 = vpop.f32.mrb[0].mxu0
    %v741 = vpop.f32.mrb[0].mxu0
    %v742 = vadd.f32 0.0, %v741
    %v743 = vpop.f32.mrb[0].mxu0
    %744 = vmatprep.mubr.bf16.mxu0 0
    %745 = vmatmul.mubr.bf16.gmra.mrb[0].mxu0 %v411
    %v746 = vpop.f32.mrb[0].mxu0
    %v747 = vadd.f32 0.0, %v746
    %v748 = vpop.f32.mrb[0].mxu0
    %v749 = vpop.f32.mrb[0].mxu0
    %v750 = vadd.f32 0.0, %v749
    %v751 = vpop.f32.mrb[0].mxu0
    %752 = vmatprep.mubr.bf16.mxu0 0
    %753 = vmatmul.mubr.bf16.gmra.mrb[0].mxu0 %v412
    %v754 = vpop.f32.mrb[0].mxu0
    %v755 = vadd.f32 0.0, %v754
    %v756 = vpop.f32.mrb[0].mxu0
    %v757 = vpop.f32.mrb[0].mxu0
    %v758 = vadd.f32 0.0, %v757
    %v759 = vpop.f32.mrb[0].mxu0
    %760 = vmatprep.mubr.bf16.mxu0 0
    %761 = vmatmul.mubr.bf16.gmra.mrb[0].mxu0 %v413
    %v762 = vpop.f32.mrb[0].mxu0
    %v763 = vadd.f32 0.0, %v762
    %v764 = vpop.f32.mrb[0].mxu0
    %v765 = vpop.f32.mrb[0].mxu0
    %v766 = vadd.f32 0.0, %v765
    %v767 = vpop.f32.mrb[0].mxu0
    %768 = vmatprep.mubr.bf16.mxu0 0
    %769 = vmatmul.mubr.bf16.gmra.mrb[0].mxu0 %v414
    %v770 = vpop.f32.mrb[0].mxu0
    %v771 = vadd.f32 0.0, %v770
    %v772 = vpop.f32.mrb[0].mxu0
    %v773 = vpop.f32.mrb[0].mxu0
    %v774 = vadd.f32 0.0, %v773
    %v775 = vpop.f32.mrb[0].mxu0
    %776 = vmatprep.mubr.bf16.mxu0 0
    %777 = vmatmul.mubr.bf16.gmra.mrb[0].mxu0 %v415
    %v778 = vpop.f32.mrb[0].mxu0
    %v779 = vadd.f32 0.0, %v778
    %v780 = vpop.f32.mrb[0].mxu0
    %v781 = vpop.f32.mrb[0].mxu0
    %v782 = vadd.f32 0.0, %v781
    %v783 = vpop.f32.mrb[0].mxu0
    %784 = vdwg.mxu0
    %v785 = vadd.f32 %v112, %v531
    %v786 = vadd.f32 %v113, %v534
    %v787 = vadd.f32 %v114, %v539
    %v788 = vadd.f32 %v115, %v542
    %v789 = vadd.f32 %v116, %v547
    %v790 = vadd.f32 %v117, %v550
    %v791 = vadd.f32 %v118, %v555
    %v792 = vadd.f32 %v119, %v558
    %v793 = vadd.f32 %v120, %v563
    %v794 = vadd.f32 %v121, %v566
    %v795 = vadd.f32 %v122, %v571
    %v796 = vadd.f32 %v123, %v574
    %v797 = vadd.f32 %v124, %v579
    %v798 = vadd.f32 %v125, %v582
    %v799 = vadd.f32 %v126, %v587
    %v800 = vadd.f32 %v127, %v590
    %v801 = vadd.f32 %v128, %v595
    %v802 = vadd.f32 %v129, %v598
    %v803 = vadd.f32 %v130, %v603
    %v804 = vadd.f32 %v131, %v606
    %v805 = vadd.f32 %v132, %v611
    %v806 = vadd.f32 %v133, %v614
    %v807 = vadd.f32 %v134, %v619
    %v808 = vadd.f32 %v135, %v622
    %v809 = vadd.f32 %v136, %v627
    %v810 = vadd.f32 %v137, %v630
    %v811 = vadd.f32 %v138, %v635
    %v812 = vadd.f32 %v139, %v638
    %v813 = vadd.f32 %v140, %v643
    %v814 = vadd.f32 %v141, %v646
    %v815 = vadd.f32 %v142, %v651
    %v816 = vadd.f32 %v143, %v654
    %v817 = vadd.f32 %v144, %v659
    %v818 = vadd.f32 %v145, %v662
    %v819 = vadd.f32 %v146, %v667
    %v820 = vadd.f32 %v147, %v670
    %v821 = vadd.f32 %v148, %v675
    %v822 = vadd.f32 %v149, %v678
    %v823 = vadd.f32 %v150, %v683
    %v824 = vadd.f32 %v151, %v686
    %v825 = vadd.f32 %v152, %v691
    %v826 = vadd.f32 %v153, %v694
    %v827 = vadd.f32 %v154, %v699
    %v828 = vadd.f32 %v155, %v702
    %v829 = vadd.f32 %v156, %v707
    %v830 = vadd.f32 %v157, %v710
    %v831 = vadd.f32 %v158, %v715
    %v832 = vadd.f32 %v159, %v718
    %v833 = vadd.f32 %v160, %v723
    %v834 = vadd.f32 %v161, %v726
    %v835 = vadd.f32 %v162, %v731
    %v836 = vadd.f32 %v163, %v734
    %v837 = vadd.f32 %v164, %v739
    %v838 = vadd.f32 %v165, %v742
    %v839 = vadd.f32 %v166, %v747
    %v840 = vadd.f32 %v167, %v750
    %v841 = vadd.f32 %v168, %v755
    %v842 = vadd.f32 %v169, %v758
    %v843 = vadd.f32 %v170, %v763
    %v844 = vadd.f32 %v171, %v766
    %v845 = vadd.f32 %v172, %v771
    %v846 = vadd.f32 %v173, %v774
    %v847 = vadd.f32 %v174, %v779
    %v848 = vadd.f32 %v175, %v782
    %849 = vst [vmem:[#allocation2] sm:$0xff] %v785
    %850 = vst [vmem:[#allocation2 + $0x8] sm:$0xff] %v786
    %851 = vst [vmem:[#allocation2 + $0x10] sm:$0xff] %v787
    %852 = vst [vmem:[#allocation2 + $0x18] sm:$0xff] %v788
    %853 = vst [vmem:[#allocation2 + $0x20] sm:$0xff] %v789
    %854 = vst [vmem:[#allocation2 + $0x28] sm:$0xff] %v790
    %855 = vst [vmem:[#allocation2 + $0x30] sm:$0xff] %v791
    %856 = vst [vmem:[#allocation2 + $0x38] sm:$0xff] %v792
    %857 = vst [vmem:[#allocation2 + $0x40] sm:$0xff] %v793
    %858 = vst [vmem:[#allocation2 + $0x48] sm:$0xff] %v794
    %859 = vst [vmem:[#allocation2 + $0x50] sm:$0xff] %v795
    %860 = vst [vmem:[#allocation2 + $0x58] sm:$0xff] %v796
    %861 = vst [vmem:[#allocation2 + $0x60] sm:$0xff] %v797
    %862 = vst [vmem:[#allocation2 + $0x68] sm:$0xff] %v798
    %863 = vst [vmem:[#allocation2 + $0x70] sm:$0xff] %v799
    %864 = vst [vmem:[#allocation2 + $0x78] sm:$0xff] %v800
    %865 = vst [vmem:[#allocation2 + $0x80] sm:$0xff] %v801
    %866 = vst [vmem:[#allocation2 + $0x88] sm:$0xff] %v802
    %867 = vst [vmem:[#allocation2 + $0x90] sm:$0xff] %v803
    %868 = vst [vmem:[#allocation2 + $0x98] sm:$0xff] %v804
    %869 = vst [vmem:[#allocation2 + $0xa0] sm:$0xff] %v805
    %870 = vst [vmem:[#allocation2 + $0xa8] sm:$0xff] %v806
    %871 = vst [vmem:[#allocation2 + $0xb0] sm:$0xff] %v807
    %872 = vst [vmem:[#allocation2 + $0xb8] sm:$0xff] %v808
    %873 = vst [vmem:[#allocation2 + $0xc0] sm:$0xff] %v809
    %874 = vst [vmem:[#allocation2 + $0xc8] sm:$0xff] %v810
    %875 = vst [vmem:[#allocation2 + $0xd0] sm:$0xff] %v811
    %876 = vst [vmem:[#allocation2 + $0xd8] sm:$0xff] %v812
    %877 = vst [vmem:[#allocation2 + $0xe0] sm:$0xff] %v813
    %878 = vst [vmem:[#allocation2 + $0xe8] sm:$0xff] %v814
    %879 = vst [vmem:[#allocation2 + $0xf0] sm:$0xff] %v815
    %880 = vst [vmem:[#allocation2 + $0xf8] sm:$0xff] %v816
    %881 = vst [vmem:[#allocation2 + $0x100] sm:$0xff] %v817
    %882 = vst [vmem:[#allocation2 + $0x108] sm:$0xff] %v818
    %883 = vst [vmem:[#allocation2 + $0x110] sm:$0xff] %v819
    %884 = vst [vmem:[#allocation2 + $0x118] sm:$0xff] %v820
    %885 = vst [vmem:[#allocation2 + $0x120] sm:$0xff] %v821
    %886 = vst [vmem:[#allocation2 + $0x128] sm:$0xff] %v822
    %887 = vst [vmem:[#allocation2 + $0x130] sm:$0xff] %v823
    %888 = vst [vmem:[#allocation2 + $0x138] sm:$0xff] %v824
    %889 = vst [vmem:[#allocation2 + $0x140] sm:$0xff] %v825
    %890 = vst [vmem:[#allocation2 + $0x148] sm:$0xff] %v826
    %891 = vst [vmem:[#allocation2 + $0x150] sm:$0xff] %v827
    %892 = vst [vmem:[#allocation2 + $0x158] sm:$0xff] %v828
    %893 = vst [vmem:[#allocation2 + $0x160] sm:$0xff] %v829
    %894 = vst [vmem:[#allocation2 + $0x168] sm:$0xff] %v830
    %895 = vst [vmem:[#allocation2 + $0x170] sm:$0xff] %v831
    %896 = vst [vmem:[#allocation2 + $0x178] sm:$0xff] %v832
    %897 = vst [vmem:[#allocation2 + $0x180] sm:$0xff] %v833
    %898 = vst [vmem:[#allocation2 + $0x188] sm:$0xff] %v834
    %899 = vst [vmem:[#allocation2 + $0x190] sm:$0xff] %v835
    %900 = vst [vmem:[#allocation2 + $0x198] sm:$0xff] %v836
    %901 = vst [vmem:[#allocation2 + $0x1a0] sm:$0xff] %v837
    %902 = vst [vmem:[#allocation2 + $0x1a8] sm:$0xff] %v838
    %903 = vst [vmem:[#allocation2 + $0x1b0] sm:$0xff] %v839
    %904 = vst [vmem:[#allocation2 + $0x1b8] sm:$0xff] %v840
    %905 = vst [vmem:[#allocation2 + $0x1c0] sm:$0xff] %v841
    %906 = vst [vmem:[#allocation2 + $0x1c8] sm:$0xff] %v842
    %907 = vst [vmem:[#allocation2 + $0x1d0] sm:$0xff] %v843
    %908 = vst [vmem:[#allocation2 + $0x1d8] sm:$0xff] %v844
    %909 = vst [vmem:[#allocation2 + $0x1e0] sm:$0xff] %v845
    %910 = vst [vmem:[#allocation2 + $0x1e8] sm:$0xff] %v846
    %911 = vst [vmem:[#allocation2 + $0x1f0] sm:$0xff] %v847
    %912 = vst [vmem:[#allocation2 + $0x1f8] sm:$0xff] %v848
    // Predicated region
    $region26: #{tpu_custom_call.1} parent=1 // pred_check
      %p913 = pneg %p44
    $region27: #{tpu_custom_call.1} parent=1 // pred_check_branch
      %915 = sbr.rel (%p913) target = $region29
    $region28: #{tpu_custom_call.1} parent=1 // pred_region
      %v916 = vld [vmem:[#allocation2] sm:$0xff]
      %v917 = vld [vmem:[#allocation2 + $0x8] sm:$0xff]
      %v918 = vld [vmem:[#allocation2 + $0x10] sm:$0xff]
      %v919 = vld [vmem:[#allocation2 + $0x18] sm:$0xff]
      %v920 = vld [vmem:[#allocation2 + $0x20] sm:$0xff]
      %v921 = vld [vmem:[#allocation2 + $0x28] sm:$0xff]
      %v922 = vld [vmem:[#allocation2 + $0x30] sm:$0xff]
      %v923 = vld [vmem:[#allocation2 + $0x38] sm:$0xff]
      %v924 = vld [vmem:[#allocation2 + $0x40] sm:$0xff]
      %v925 = vld [vmem:[#allocation2 + $0x48] sm:$0xff]
      %v926 = vld [vmem:[#allocation2 + $0x50] sm:$0xff]
      %v927 = vld [vmem:[#allocation2 + $0x58] sm:$0xff]
      %v928 = vld [vmem:[#allocation2 + $0x60] sm:$0xff]
      %v929 = vld [vmem:[#allocation2 + $0x68] sm:$0xff]
      %v930 = vld [vmem:[#allocation2 + $0x70] sm:$0xff]
      %v931 = vld [vmem:[#allocation2 + $0x78] sm:$0xff]
      %v932 = vld [vmem:[#allocation2 + $0x80] sm:$0xff]
      %v933 = vld [vmem:[#allocation2 + $0x88] sm:$0xff]
      %v934 = vld [vmem:[#allocation2 + $0x90] sm:$0xff]
      %v935 = vld [vmem:[#allocation2 + $0x98] sm:$0xff]
      %v936 = vld [vmem:[#allocation2 + $0xa0] sm:$0xff]
      %v937 = vld [vmem:[#allocation2 + $0xa8] sm:$0xff]
      %v938 = vld [vmem:[#allocation2 + $0xb0] sm:$0xff]
      %v939 = vld [vmem:[#allocation2 + $0xb8] sm:$0xff]
      %v940 = vld [vmem:[#allocation2 + $0xc0] sm:$0xff]
      %v941 = vld [vmem:[#allocation2 + $0xc8] sm:$0xff]
      %v942 = vld [vmem:[#allocation2 + $0xd0] sm:$0xff]
      %v943 = vld [vmem:[#allocation2 + $0xd8] sm:$0xff]
      %v944 = vld [vmem:[#allocation2 + $0xe0] sm:$0xff]
      %v945 = vld [vmem:[#allocation2 + $0xe8] sm:$0xff]
      %v946 = vld [vmem:[#allocation2 + $0xf0] sm:$0xff]
      %v947 = vld [vmem:[#allocation2 + $0xf8] sm:$0xff]
      %v948 = vld [vmem:[#allocation2 + $0x100] sm:$0xff]
      %v949 = vld [vmem:[#allocation2 + $0x108] sm:$0xff]
      %v950 = vld [vmem:[#allocation2 + $0x110] sm:$0xff]
      %v951 = vld [vmem:[#allocation2 + $0x118] sm:$0xff]
      %v952 = vld [vmem:[#allocation2 + $0x120] sm:$0xff]
      %v953 = vld [vmem:[#allocation2 + $0x128] sm:$0xff]
      %v954 = vld [vmem:[#allocation2 + $0x130] sm:$0xff]
      %v955 = vld [vmem:[#allocation2 + $0x138] sm:$0xff]
      %v956 = vld [vmem:[#allocation2 + $0x140] sm:$0xff]
      %v957 = vld [vmem:[#allocation2 + $0x148] sm:$0xff]
      %v958 = vld [vmem:[#allocation2 + $0x150] sm:$0xff]
      %v959 = vld [vmem:[#allocation2 + $0x158] sm:$0xff]
      %v960 = vld [vmem:[#allocation2 + $0x160] sm:$0xff]
      %v961 = vld [vmem:[#allocation2 + $0x168] sm:$0xff]
      %v962 = vld [vmem:[#allocation2 + $0x170] sm:$0xff]
      %v963 = vld [vmem:[#allocation2 + $0x178] sm:$0xff]
      %v964 = vld [vmem:[#allocation2 + $0x180] sm:$0xff]
      %v965 = vld [vmem:[#allocation2 + $0x188] sm:$0xff]
      %v966 = vld [vmem:[#allocation2 + $0x190] sm:$0xff]
      %v967 = vld [vmem:[#allocation2 + $0x198] sm:$0xff]
      %v968 = vld [vmem:[#allocation2 + $0x1a0] sm:$0xff]
      %v969 = vld [vmem:[#allocation2 + $0x1a8] sm:$0xff]
      %v970 = vld [vmem:[#allocation2 + $0x1b0] sm:$0xff]
      %v971 = vld [vmem:[#allocation2 + $0x1b8] sm:$0xff]
      %v972 = vld [vmem:[#allocation2 + $0x1c0] sm:$0xff]
      %v973 = vld [vmem:[#allocation2 + $0x1c8] sm:$0xff]
      %v974 = vld [vmem:[#allocation2 + $0x1d0] sm:$0xff]
      %v975 = vld [vmem:[#allocation2 + $0x1d8] sm:$0xff]
      %v976 = vld [vmem:[#allocation2 + $0x1e0] sm:$0xff]
      %v977 = vld [vmem:[#allocation2 + $0x1e8] sm:$0xff]
      %v978 = vld [vmem:[#allocation2 + $0x1f0] sm:$0xff]
      %v979 = vld [vmem:[#allocation2 + $0x1f8] sm:$0xff]
      %v980 = vld [vmem:[%s2] sm:$0x1]
      %v982 = vlaneseq
      %v983 = vshrl.u32 %v982, 7
      %v984 = vsub.s32 0, %v983
      %v985 = vrot.slane %v980, %v984
      %v987 = vadd.f32 %v916, %v985
      %v988 = vadd.f32 %v917, %v985
      %v989 = vadd.f32 %v918, %v985
      %v990 = vadd.f32 %v919, %v985
      %v991 = vadd.f32 %v920, %v985
      %v992 = vadd.f32 %v921, %v985
      %v993 = vadd.f32 %v922, %v985
      %v994 = vadd.f32 %v923, %v985
      %v995 = vadd.f32 %v924, %v985
      %v996 = vadd.f32 %v925, %v985
      %v997 = vadd.f32 %v926, %v985
      %v998 = vadd.f32 %v927, %v985
      %v999 = vadd.f32 %v928, %v985
      %v1000 = vadd.f32 %v929, %v985
      %v1001 = vadd.f32 %v930, %v985
      %v1002 = vadd.f32 %v931, %v985
      %v1003 = vadd.f32 %v932, %v985
      %v1004 = vadd.f32 %v933, %v985
      %v1005 = vadd.f32 %v934, %v985
      %v1006 = vadd.f32 %v935, %v985
      %v1007 = vadd.f32 %v936, %v985
      %v1008 = vadd.f32 %v937, %v985
      %v1009 = vadd.f32 %v938, %v985
      %v1010 = vadd.f32 %v939, %v985
      %v1011 = vadd.f32 %v940, %v985
      %v1012 = vadd.f32 %v941, %v985
      %v1013 = vadd.f32 %v942, %v985
      %v1014 = vadd.f32 %v943, %v985
      %v1015 = vadd.f32 %v944, %v985
      %v1016 = vadd.f32 %v945, %v985
      %v1017 = vadd.f32 %v946, %v985
      %v1018 = vadd.f32 %v947, %v985
      %v1019 = vadd.f32 %v948, %v985
      %v1020 = vadd.f32 %v949, %v985
      %v1021 = vadd.f32 %v950, %v985
      %v1022 = vadd.f32 %v951, %v985
      %v1023 = vadd.f32 %v952, %v985
      %v1024 = vadd.f32 %v953, %v985
      %v1025 = vadd.f32 %v954, %v985
      %v1026 = vadd.f32 %v955, %v985
      %v1027 = vadd.f32 %v956, %v985
      %v1028 = vadd.f32 %v957, %v985
      %v1029 = vadd.f32 %v958, %v985
      %v1030 = vadd.f32 %v959, %v985
      %v1031 = vadd.f32 %v960, %v985
      %v1032 = vadd.f32 %v961, %v985
      %v1033 = vadd.f32 %v962, %v985
      %v1034 = vadd.f32 %v963, %v985
      %v1035 = vadd.f32 %v964, %v985
      %v1036 = vadd.f32 %v965, %v985
      %v1037 = vadd.f32 %v966, %v985
      %v1038 = vadd.f32 %v967, %v985
      %v1039 = vadd.f32 %v968, %v985
      %v1040 = vadd.f32 %v969, %v985
      %v1041 = vadd.f32 %v970, %v985
      %v1042 = vadd.f32 %v971, %v985
      %v1043 = vadd.f32 %v972, %v985
      %v1044 = vadd.f32 %v973, %v985
      %v1045 = vadd.f32 %v974, %v985
      %v1046 = vadd.f32 %v975, %v985
      %v1047 = vadd.f32 %v976, %v985
      %v1048 = vadd.f32 %v977, %v985
      %v1049 = vadd.f32 %v978, %v985
      %v1050 = vadd.f32 %v979, %v985
      %v1051 = vxor.u32 %v987, 2147483648
      %v1052 = vxor.u32 %v988, 2147483648
      %v1053 = vxor.u32 %v989, 2147483648
      %v1054 = vxor.u32 %v990, 2147483648
      %v1055 = vxor.u32 %v991, 2147483648
      %v1056 = vxor.u32 %v992, 2147483648
      %v1057 = vxor.u32 %v993, 2147483648
      %v1058 = vxor.u32 %v994, 2147483648
      %v1059 = vxor.u32 %v995, 2147483648
      %v1060 = vxor.u32 %v996, 2147483648
      %v1061 = vxor.u32 %v997, 2147483648
      %v1062 = vxor.u32 %v998, 2147483648
      %v1063 = vxor.u32 %v999, 2147483648
      %v1064 = vxor.u32 %v1000, 2147483648
      %v1065 = vxor.u32 %v1001, 2147483648
      %v1066 = vxor.u32 %v1002, 2147483648
      %v1067 = vxor.u32 %v1003, 2147483648
      %v1068 = vxor.u32 %v1004, 2147483648
      %v1069 = vxor.u32 %v1005, 2147483648
      %v1070 = vxor.u32 %v1006, 2147483648
      %v1071 = vxor.u32 %v1007, 2147483648
      %v1072 = vxor.u32 %v1008, 2147483648
      %v1073 = vxor.u32 %v1009, 2147483648
      %v1074 = vxor.u32 %v1010, 2147483648
      %v1075 = vxor.u32 %v1011, 2147483648
      %v1076 = vxor.u32 %v1012, 2147483648
      %v1077 = vxor.u32 %v1013, 2147483648
      %v1078 = vxor.u32 %v1014, 2147483648
      %v1079 = vxor.u32 %v1015, 2147483648
      %v1080 = vxor.u32 %v1016, 2147483648
      %v1081 = vxor.u32 %v1017, 2147483648
      %v1082 = vxor.u32 %v1018, 2147483648
      %v1083 = vxor.u32 %v1019, 2147483648
      %v1084 = vxor.u32 %v1020, 2147483648
      %v1085 = vxor.u32 %v1021, 2147483648
      %v1086 = vxor.u32 %v1022, 2147483648
      %v1087 = vxor.u32 %v1023, 2147483648
      %v1088 = vxor.u32 %v1024, 2147483648
      %v1089 = vxor.u32 %v1025, 2147483648
      %v1090 = vxor.u32 %v1026, 2147483648
      %v1091 = vxor.u32 %v1027, 2147483648
      %v1092 = vxor.u32 %v1028, 2147483648
      %v1093 = vxor.u32 %v1029, 2147483648
      %v1094 = vxor.u32 %v1030, 2147483648
      %v1095 = vxor.u32 %v1031, 2147483648
      %v1096 = vxor.u32 %v1032, 2147483648
      %v1097 = vxor.u32 %v1033, 2147483648
      %v1098 = vxor.u32 %v1034, 2147483648
      %v1099 = vxor.u32 %v1035, 2147483648
      %v1100 = vxor.u32 %v1036, 2147483648
      %v1101 = vxor.u32 %v1037, 2147483648
      %v1102 = vxor.u32 %v1038, 2147483648
      %v1103 = vxor.u32 %v1039, 2147483648
      %v1104 = vxor.u32 %v1040, 2147483648
      %v1105 = vxor.u32 %v1041, 2147483648
      %v1106 = vxor.u32 %v1042, 2147483648
      %v1107 = vxor.u32 %v1043, 2147483648
      %v1108 = vxor.u32 %v1044, 2147483648
      %v1109 = vxor.u32 %v1045, 2147483648
      %v1110 = vxor.u32 %v1046, 2147483648
      %v1111 = vxor.u32 %v1047, 2147483648
      %v1112 = vxor.u32 %v1048, 2147483648
      %v1113 = vxor.u32 %v1049, 2147483648
      %v1114 = vxor.u32 %v1050, 2147483648
      %v1115 = vmul.f32 %v1051, 1.442695
      %v1116 = vpow.pop %v1115
      %v1117 = vmul.f32 %v1052, 1.442695
      %v1118 = vpow.pop %v1117
      %v1119 = vmul.f32 %v1053, 1.442695
      %v1120 = vpow.pop %v1119
      %v1121 = vmul.f32 %v1054, 1.442695
      %v1122 = vpow.pop %v1121
      %v1123 = vmul.f32 %v1055, 1.442695
      %v1124 = vpow.pop %v1123
      %v1125 = vmul.f32 %v1056, 1.442695
      %v1126 = vpow.pop %v1125
      %v1127 = vmul.f32 %v1057, 1.442695
      %v1128 = vpow.pop %v1127
      %v1129 = vmul.f32 %v1058, 1.442695
      %v1130 = vpow.pop %v1129
      %v1131 = vmul.f32 %v1059, 1.442695
      %v1132 = vpow.pop %v1131
      %v1133 = vmul.f32 %v1060, 1.442695
      %v1134 = vpow.pop %v1133
      %v1135 = vmul.f32 %v1061, 1.442695
      %v1136 = vpow.pop %v1135
      %v1137 = vmul.f32 %v1062, 1.442695
      %v1138 = vpow.pop %v1137
      %v1139 = vmul.f32 %v1063, 1.442695
      %v1140 = vpow.pop %v1139
      %v1141 = vmul.f32 %v1064, 1.442695
      %v1142 = vpow.pop %v1141
      %v1143 = vmul.f32 %v1065, 1.442695
      %v1144 = vpow.pop %v1143
      %v1145 = vmul.f32 %v1066, 1.442695
      %v1146 = vpow.pop %v1145
      %v1147 = vmul.f32 %v1067, 1.442695
      %v1148 = vpow.pop %v1147
      %v1149 = vmul.f32 %v1068, 1.442695
      %v1150 = vpow.pop %v1149
      %v1151 = vmul.f32 %v1069, 1.442695
      %v1152 = vpow.pop %v1151
      %v1153 = vmul.f32 %v1070, 1.442695
      %v1154 = vpow.pop %v1153
      %v1155 = vmul.f32 %v1071, 1.442695
      %v1156 = vpow.pop %v1155
      %v1157 = vmul.f32 %v1072, 1.442695
      %v1158 = vpow.pop %v1157
      %v1159 = vmul.f32 %v1073, 1.442695
      %v1160 = vpow.pop %v1159
      %v1161 = vmul.f32 %v1074, 1.442695
      %v1162 = vpow.pop %v1161
      %v1163 = vmul.f32 %v1075, 1.442695
      %v1164 = vpow.pop %v1163
      %v1165 = vmul.f32 %v1076, 1.442695
      %v1166 = vpow.pop %v1165
      %v1167 = vmul.f32 %v1077, 1.442695
      %v1168 = vpow.pop %v1167
      %v1169 = vmul.f32 %v1078, 1.442695
      %v1170 = vpow.pop %v1169
      %v1171 = vmul.f32 %v1079, 1.442695
      %v1172 = vpow.pop %v1171
      %v1173 = vmul.f32 %v1080, 1.442695
      %v1174 = vpow.pop %v1173
      %v1175 = vmul.f32 %v1081, 1.442695
      %v1176 = vpow.pop %v1175
      %v1177 = vmul.f32 %v1082, 1.442695
      %v1178 = vpow.pop %v1177
      %v1179 = vmul.f32 %v1083, 1.442695
      %v1180 = vpow.pop %v1179
      %v1181 = vmul.f32 %v1084, 1.442695
      %v1182 = vpow.pop %v1181
      %v1183 = vmul.f32 %v1085, 1.442695
      %v1184 = vpow.pop %v1183
      %v1185 = vmul.f32 %v1086, 1.442695
      %v1186 = vpow.pop %v1185
      %v1187 = vmul.f32 %v1087, 1.442695
      %v1188 = vpow.pop %v1187
      %v1189 = vmul.f32 %v1088, 1.442695
      %v1190 = vpow.pop %v1189
      %v1191 = vmul.f32 %v1089, 1.442695
      %v1192 = vpow.pop %v1191
      %v1193 = vmul.f32 %v1090, 1.442695
      %v1194 = vpow.pop %v1193
      %v1195 = vmul.f32 %v1091, 1.442695
      %v1196 = vpow.pop %v1195
      %v1197 = vmul.f32 %v1092, 1.442695
      %v1198 = vpow.pop %v1197
      %v1199 = vmul.f32 %v1093, 1.442695
      %v1200 = vpow.pop %v1199
      %v1201 = vmul.f32 %v1094, 1.442695
      %v1202 = vpow.pop %v1201
      %v1203 = vmul.f32 %v1095, 1.442695
      %v1204 = vpow.pop %v1203
      %v1205 = vmul.f32 %v1096, 1.442695
      %v1206 = vpow.pop %v1205
      %v1207 = vmul.f32 %v1097, 1.442695
      %v1208 = vpow.pop %v1207
      %v1209 = vmul.f32 %v1098, 1.442695
      %v1210 = vpow.pop %v1209
      %v1211 = vmul.f32 %v1099, 1.442695
      %v1212 = vpow.pop %v1211
      %v1213 = vmul.f32 %v1100, 1.442695
      %v1214 = vpow.pop %v1213
      %v1215 = vmul.f32 %v1101, 1.442695
      %v1216 = vpow.pop %v1215
      %v1217 = vmul.f32 %v1102, 1.442695
      %v1218 = vpow.pop %v1217
      %v1219 = vmul.f32 %v1103, 1.442695
      %v1220 = vpow.pop %v1219
      %v1221 = vmul.f32 %v1104, 1.442695
      %v1222 = vpow.pop %v1221
      %v1223 = vmul.f32 %v1105, 1.442695
      %v1224 = vpow.pop %v1223
      %v1225 = vmul.f32 %v1106, 1.442695
      %v1226 = vpow.pop %v1225
      %v1227 = vmul.f32 %v1107, 1.442695
      %v1228 = vpow.pop %v1227
      %v1229 = vmul.f32 %v1108, 1.442695
      %v1230 = vpow.pop %v1229
      %v1231 = vmul.f32 %v1109, 1.442695
      %v1232 = vpow.pop %v1231
      %v1233 = vmul.f32 %v1110, 1.442695
      %v1234 = vpow.pop %v1233
      %v1235 = vmul.f32 %v1111, 1.442695
      %v1236 = vpow.pop %v1235
      %v1237 = vmul.f32 %v1112, 1.442695
      %v1238 = vpow.pop %v1237
      %v1239 = vmul.f32 %v1113, 1.442695
      %v1240 = vpow.pop %v1239
      %v1241 = vmul.f32 %v1114, 1.442695
      %v1242 = vpow.pop %v1241
      %v1243 = vadd.f32 %v1116, 1.0
      %v1244 = vadd.f32 %v1118, 1.0
      %v1245 = vadd.f32 %v1120, 1.0
      %v1246 = vadd.f32 %v1122, 1.0
      %v1247 = vadd.f32 %v1124, 1.0
      %v1248 = vadd.f32 %v1126, 1.0
      %v1249 = vadd.f32 %v1128, 1.0
      %v1250 = vadd.f32 %v1130, 1.0
      %v1251 = vadd.f32 %v1132, 1.0
      %v1252 = vadd.f32 %v1134, 1.0
      %v1253 = vadd.f32 %v1136, 1.0
      %v1254 = vadd.f32 %v1138, 1.0
      %v1255 = vadd.f32 %v1140, 1.0
      %v1256 = vadd.f32 %v1142, 1.0
      %v1257 = vadd.f32 %v1144, 1.0
      %v1258 = vadd.f32 %v1146, 1.0
      %v1259 = vadd.f32 %v1148, 1.0
      %v1260 = vadd.f32 %v1150, 1.0
      %v1261 = vadd.f32 %v1152, 1.0
      %v1262 = vadd.f32 %v1154, 1.0
      %v1263 = vadd.f32 %v1156, 1.0
      %v1264 = vadd.f32 %v1158, 1.0
      %v1265 = vadd.f32 %v1160, 1.0
      %v1266 = vadd.f32 %v1162, 1.0
      %v1267 = vadd.f32 %v1164, 1.0
      %v1268 = vadd.f32 %v1166, 1.0
      %v1269 = vadd.f32 %v1168, 1.0
      %v1270 = vadd.f32 %v1170, 1.0
      %v1271 = vadd.f32 %v1172, 1.0
      %v1272 = vadd.f32 %v1174, 1.0
      %v1273 = vadd.f32 %v1176, 1.0
      %v1274 = vadd.f32 %v1178, 1.0
      %v1275 = vadd.f32 %v1180, 1.0
      %v1276 = vadd.f32 %v1182, 1.0
      %v1277 = vadd.f32 %v1184, 1.0
      %v1278 = vadd.f32 %v1186, 1.0
      %v1279 = vadd.f32 %v1188, 1.0
      %v1280 = vadd.f32 %v1190, 1.0
      %v1281 = vadd.f32 %v1192, 1.0
      %v1282 = vadd.f32 %v1194, 1.0
      %v1283 = vadd.f32 %v1196, 1.0
      %v1284 = vadd.f32 %v1198, 1.0
      %v1285 = vadd.f32 %v1200, 1.0
      %v1286 = vadd.f32 %v1202, 1.0
      %v1287 = vadd.f32 %v1204, 1.0
      %v1288 = vadd.f32 %v1206, 1.0
      %v1289 = vadd.f32 %v1208, 1.0
      %v1290 = vadd.f32 %v1210, 1.0
      %v1291 = vadd.f32 %v1212, 1.0
      %v1292 = vadd.f32 %v1214, 1.0
      %v1293 = vadd.f32 %v1216, 1.0
      %v1294 = vadd.f32 %v1218, 1.0
      %v1295 = vadd.f32 %v1220, 1.0
      %v1296 = vadd.f32 %v1222, 1.0
      %v1297 = vadd.f32 %v1224, 1.0
      %v1298 = vadd.f32 %v1226, 1.0
      %v1299 = vadd.f32 %v1228, 1.0
      %v1300 = vadd.f32 %v1230, 1.0
      %v1301 = vadd.f32 %v1232, 1.0
      %v1302 = vadd.f32 %v1234, 1.0
      %v1303 = vadd.f32 %v1236, 1.0
      %v1304 = vadd.f32 %v1238, 1.0
      %v1305 = vadd.f32 %v1240, 1.0
      %v1306 = vadd.f32 %v1242, 1.0
      %v1307 = vrcp.pop %v1243
      %v1308 = vmul.f32 1.0, %v1307
      %v1309 = vrcp.pop %v1244
      %v1310 = vmul.f32 1.0, %v1309
      %v1311 = vrcp.pop %v1245
      %v1312 = vmul.f32 1.0, %v1311
      %v1313 = vrcp.pop %v1246
      %v1314 = vmul.f32 1.0, %v1313
      %v1315 = vrcp.pop %v1247
      %v1316 = vmul.f32 1.0, %v1315
      %v1317 = vrcp.pop %v1248
      %v1318 = vmul.f32 1.0, %v1317
      %v1319 = vrcp.pop %v1249
      %v1320 = vmul.f32 1.0, %v1319
      %v1321 = vrcp.pop %v1250
      %v1322 = vmul.f32 1.0, %v1321
      %v1323 = vrcp.pop %v1251
      %v1324 = vmul.f32 1.0, %v1323
      %v1325 = vrcp.pop %v1252
      %v1326 = vmul.f32 1.0, %v1325
      %v1327 = vrcp.pop %v1253
      %v1328 = vmul.f32 1.0, %v1327
      %v1329 = vrcp.pop %v1254
      %v1330 = vmul.f32 1.0, %v1329
      %v1331 = vrcp.pop %v1255
      %v1332 = vmul.f32 1.0, %v1331
      %v1333 = vrcp.pop %v1256
      %v1334 = vmul.f32 1.0, %v1333
      %v1335 = vrcp.pop %v1257
      %v1336 = vmul.f32 1.0, %v1335
      %v1337 = vrcp.pop %v1258
      %v1338 = vmul.f32 1.0, %v1337
      %v1339 = vrcp.pop %v1259
      %v1340 = vmul.f32 1.0, %v1339
      %v1341 = vrcp.pop %v1260
      %v1342 = vmul.f32 1.0, %v1341
      %v1343 = vrcp.pop %v1261
      %v1344 = vmul.f32 1.0, %v1343
      %v1345 = vrcp.pop %v1262
      %v1346 = vmul.f32 1.0, %v1345
      %v1347 = vrcp.pop %v1263
      %v1348 = vmul.f32 1.0, %v1347
      %v1349 = vrcp.pop %v1264
      %v1350 = vmul.f32 1.0, %v1349
      %v1351 = vrcp.pop %v1265
      %v1352 = vmul.f32 1.0, %v1351
      %v1353 = vrcp.pop %v1266
      %v1354 = vmul.f32 1.0, %v1353
      %v1355 = vrcp.pop %v1267
      %v1356 = vmul.f32 1.0, %v1355
      %v1357 = vrcp.pop %v1268
      %v1358 = vmul.f32 1.0, %v1357
      %v1359 = vrcp.pop %v1269
      %v1360 = vmul.f32 1.0, %v1359
      %v1361 = vrcp.pop %v1270
      %v1362 = vmul.f32 1.0, %v1361
      %v1363 = vrcp.pop %v1271
      %v1364 = vmul.f32 1.0, %v1363
      %v1365 = vrcp.pop %v1272
      %v1366 = vmul.f32 1.0, %v1365
      %v1367 = vrcp.pop %v1273
      %v1368 = vmul.f32 1.0, %v1367
      %v1369 = vrcp.pop %v1274
      %v1370 = vmul.f32 1.0, %v1369
      %v1371 = vrcp.pop %v1275
      %v1372 = vmul.f32 1.0, %v1371
      %v1373 = vrcp.pop %v1276
      %v1374 = vmul.f32 1.0, %v1373
      %v1375 = vrcp.pop %v1277
      %v1376 = vmul.f32 1.0, %v1375
      %v1377 = vrcp.pop %v1278
      %v1378 = vmul.f32 1.0, %v1377
      %v1379 = vrcp.pop %v1279
      %v1380 = vmul.f32 1.0, %v1379
      %v1381 = vrcp.pop %v1280
      %v1382 = vmul.f32 1.0, %v1381
      %v1383 = vrcp.pop %v1281
      %v1384 = vmul.f32 1.0, %v1383
      %v1385 = vrcp.pop %v1282
      %v1386 = vmul.f32 1.0, %v1385
      %v1387 = vrcp.pop %v1283
      %v1388 = vmul.f32 1.0, %v1387
      %v1389 = vrcp.pop %v1284
      %v1390 = vmul.f32 1.0, %v1389
      %v1391 = vrcp.pop %v1285
      %v1392 = vmul.f32 1.0, %v1391
      %v1393 = vrcp.pop %v1286
      %v1394 = vmul.f32 1.0, %v1393
      %v1395 = vrcp.pop %v1287
      %v1396 = vmul.f32 1.0, %v1395
      %v1397 = vrcp.pop %v1288
      %v1398 = vmul.f32 1.0, %v1397
      %v1399 = vrcp.pop %v1289
      %v1400 = vmul.f32 1.0, %v1399
      %v1401 = vrcp.pop %v1290
      %v1402 = vmul.f32 1.0, %v1401
      %v1403 = vrcp.pop %v1291
      %v1404 = vmul.f32 1.0, %v1403
      %v1405 = vrcp.pop %v1292
      %v1406 = vmul.f32 1.0, %v1405
      %v1407 = vrcp.pop %v1293
      %v1408 = vmul.f32 1.0, %v1407
      %v1409 = vrcp.pop %v1294
      %v1410 = vmul.f32 1.0, %v1409
      %v1411 = vrcp.pop %v1295
      %v1412 = vmul.f32 1.0, %v1411
      %v1413 = vrcp.pop %v1296
      %v1414 = vmul.f32 1.0, %v1413
      %v1415 = vrcp.pop %v1297
      %v1416 = vmul.f32 1.0, %v1415
      %v1417 = vrcp.pop %v1298
      %v1418 = vmul.f32 1.0, %v1417
      %v1419 = vrcp.pop %v1299
      %v1420 = vmul.f32 1.0, %v1419
      %v1421 = vrcp.pop %v1300
      %v1422 = vmul.f32 1.0, %v1421
      %v1423 = vrcp.pop %v1301
      %v1424 = vmul.f32 1.0, %v1423
      %v1425 = vrcp.pop %v1302
      %v1426 = vmul.f32 1.0, %v1425
      %v1427 = vrcp.pop %v1303
      %v1428 = vmul.f32 1.0, %v1427
      %v1429 = vrcp.pop %v1304
      %v1430 = vmul.f32 1.0, %v1429
      %v1431 = vrcp.pop %v1305
      %v1432 = vmul.f32 1.0, %v1431
      %v1433 = vrcp.pop %v1306
      %v1434 = vmul.f32 1.0, %v1433
      %v1435 = vmul.f32 %v987, %v1308
      %v1436 = vmul.f32 %v988, %v1310
      %v1437 = vmul.f32 %v989, %v1312
      %v1438 = vmul.f32 %v990, %v1314
      %v1439 = vmul.f32 %v991, %v1316
      %v1440 = vmul.f32 %v992, %v1318
      %v1441 = vmul.f32 %v993, %v1320
      %v1442 = vmul.f32 %v994, %v1322
      %v1443 = vmul.f32 %v995, %v1324
      %v1444 = vmul.f32 %v996, %v1326
      %v1445 = vmul.f32 %v997, %v1328
      %v1446 = vmul.f32 %v998, %v1330
      %v1447 = vmul.f32 %v999, %v1332
      %v1448 = vmul.f32 %v1000, %v1334
      %v1449 = vmul.f32 %v1001, %v1336
      %v1450 = vmul.f32 %v1002, %v1338
      %v1451 = vmul.f32 %v1003, %v1340
      %v1452 = vmul.f32 %v1004, %v1342
      %v1453 = vmul.f32 %v1005, %v1344
      %v1454 = vmul.f32 %v1006, %v1346
      %v1455 = vmul.f32 %v1007, %v1348
      %v1456 = vmul.f32 %v1008, %v1350
      %v1457 = vmul.f32 %v1009, %v1352
      %v1458 = vmul.f32 %v1010, %v1354
      %v1459 = vmul.f32 %v1011, %v1356
      %v1460 = vmul.f32 %v1012, %v1358
      %v1461 = vmul.f32 %v1013, %v1360
      %v1462 = vmul.f32 %v1014, %v1362
      %v1463 = vmul.f32 %v1015, %v1364
      %v1464 = vmul.f32 %v1016, %v1366
      %v1465 = vmul.f32 %v1017, %v1368
      %v1466 = vmul.f32 %v1018, %v1370
      %v1467 = vmul.f32 %v1019, %v1372
      %v1468 = vmul.f32 %v1020, %v1374
      %v1469 = vmul.f32 %v1021, %v1376
      %v1470 = vmul.f32 %v1022, %v1378
      %v1471 = vmul.f32 %v1023, %v1380
      %v1472 = vmul.f32 %v1024, %v1382
      %v1473 = vmul.f32 %v1025, %v1384
      %v1474 = vmul.f32 %v1026, %v1386
      %v1475 = vmul.f32 %v1027, %v1388
      %v1476 = vmul.f32 %v1028, %v1390
      %v1477 = vmul.f32 %v1029, %v1392
      %v1478 = vmul.f32 %v1030, %v1394
      %v1479 = vmul.f32 %v1031, %v1396
      %v1480 = vmul.f32 %v1032, %v1398
      %v1481 = vmul.f32 %v1033, %v1400
      %v1482 = vmul.f32 %v1034, %v1402
      %v1483 = vmul.f32 %v1035, %v1404
      %v1484 = vmul.f32 %v1036, %v1406
      %v1485 = vmul.f32 %v1037, %v1408
      %v1486 = vmul.f32 %v1038, %v1410
      %v1487 = vmul.f32 %v1039, %v1412
      %v1488 = vmul.f32 %v1040, %v1414
      %v1489 = vmul.f32 %v1041, %v1416
      %v1490 = vmul.f32 %v1042, %v1418
      %v1491 = vmul.f32 %v1043, %v1420
      %v1492 = vmul.f32 %v1044, %v1422
      %v1493 = vmul.f32 %v1045, %v1424
      %v1494 = vmul.f32 %v1046, %v1426
      %v1495 = vmul.f32 %v1047, %v1428
      %v1496 = vmul.f32 %v1048, %v1430
      %v1497 = vmul.f32 %v1049, %v1432
      %v1498 = vmul.f32 %v1050, %v1434
      %1499 = vst [vmem:[#allocation8] sm:$0xff] %v1435
      %1500 = vst [vmem:[#allocation8 + $0x8] sm:$0xff] %v1436
      %1501 = vst [vmem:[#allocation8 + $0x10] sm:$0xff] %v1437
      %1502 = vst [vmem:[#allocation8 + $0x18] sm:$0xff] %v1438
      %1503 = vst [vmem:[#allocation8 + $0x20] sm:$0xff] %v1439
      %1504 = vst [vmem:[#allocation8 + $0x28] sm:$0xff] %v1440
      %1505 = vst [vmem:[#allocation8 + $0x30] sm:$0xff] %v1441
      %1506 = vst [vmem:[#allocation8 + $0x38] sm:$0xff] %v1442
      %1507 = vst [vmem:[#allocation8 + $0x40] sm:$0xff] %v1443
      %1508 = vst [vmem:[#allocation8 + $0x48] sm:$0xff] %v1444
      %1509 = vst [vmem:[#allocation8 + $0x50] sm:$0xff] %v1445
      %1510 = vst [vmem:[#allocation8 + $0x58] sm:$0xff] %v1446
      %1511 = vst [vmem:[#allocation8 + $0x60] sm:$0xff] %v1447
      %1512 = vst [vmem:[#allocation8 + $0x68] sm:$0xff] %v1448
      %1513 = vst [vmem:[#allocation8 + $0x70] sm:$0xff] %v1449
      %1514 = vst [vmem:[#allocation8 + $0x78] sm:$0xff] %v1450
      %1515 = vst [vmem:[#allocation8 + $0x80] sm:$0xff] %v1451
      %1516 = vst [vmem:[#allocation8 + $0x88] sm:$0xff] %v1452
      %1517 = vst [vmem:[#allocation8 + $0x90] sm:$0xff] %v1453
      %1518 = vst [vmem:[#allocation8 + $0x98] sm:$0xff] %v1454
      %1519 = vst [vmem:[#allocation8 + $0xa0] sm:$0xff] %v1455
      %1520 = vst [vmem:[#allocation8 + $0xa8] sm:$0xff] %v1456
      %1521 = vst [vmem:[#allocation8 + $0xb0] sm:$0xff] %v1457
      %1522 = vst [vmem:[#allocation8 + $0xb8] sm:$0xff] %v1458
      %1523 = vst [vmem:[#allocation8 + $0xc0] sm:$0xff] %v1459
      %1524 = vst [vmem:[#allocation8 + $0xc8] sm:$0xff] %v1460
      %1525 = vst [vmem:[#allocation8 + $0xd0] sm:$0xff] %v1461
      %1526 = vst [vmem:[#allocation8 + $0xd8] sm:$0xff] %v1462
      %1527 = vst [vmem:[#allocation8 + $0xe0] sm:$0xff] %v1463
      %1528 = vst [vmem:[#allocation8 + $0xe8] sm:$0xff] %v1464
      %1529 = vst [vmem:[#allocation8 + $0xf0] sm:$0xff] %v1465
      %1530 = vst [vmem:[#allocation8 + $0xf8] sm:$0xff] %v1466
      %1531 = vst [vmem:[#allocation8 + $0x100] sm:$0xff] %v1467
      %1532 = vst [vmem:[#allocation8 + $0x108] sm:$0xff] %v1468
      %1533 = vst [vmem:[#allocation8 + $0x110] sm:$0xff] %v1469
      %1534 = vst [vmem:[#allocation8 + $0x118] sm:$0xff] %v1470
      %1535 = vst [vmem:[#allocation8 + $0x120] sm:$0xff] %v1471
      %1536 = vst [vmem:[#allocation8 + $0x128] sm:$0xff] %v1472
      %1537 = vst [vmem:[#allocation8 + $0x130] sm:$0xff] %v1473
      %1538 = vst [vmem:[#allocation8 + $0x138] sm:$0xff] %v1474
      %1539 = vst [vmem:[#allocation8 + $0x140] sm:$0xff] %v1475
      %1540 = vst [vmem:[#allocation8 + $0x148] sm:$0xff] %v1476
      %1541 = vst [vmem:[#allocation8 + $0x150] sm:$0xff] %v1477
      %1542 = vst [vmem:[#allocation8 + $0x158] sm:$0xff] %v1478
      %1543 = vst [vmem:[#allocation8 + $0x160] sm:$0xff] %v1479
      %1544 = vst [vmem:[#allocation8 + $0x168] sm:$0xff] %v1480
      %1545 = vst [vmem:[#allocation8 + $0x170] sm:$0xff] %v1481
      %1546 = vst [vmem:[#allocation8 + $0x178] sm:$0xff] %v1482
      %1547 = vst [vmem:[#allocation8 + $0x180] sm:$0xff] %v1483
      %1548 = vst [vmem:[#allocation8 + $0x188] sm:$0xff] %v1484
      %1549 = vst [vmem:[#allocation8 + $0x190] sm:$0xff] %v1485
      %1550 = vst [vmem:[#allocation8 + $0x198] sm:$0xff] %v1486
      %1551 = vst [vmem:[#allocation8 + $0x1a0] sm:$0xff] %v1487
      %1552 = vst [vmem:[#allocation8 + $0x1a8] sm:$0xff] %v1488
      %1553 = vst [vmem:[#allocation8 + $0x1b0] sm:$0xff] %v1489
      %1554 = vst [vmem:[#allocation8 + $0x1b8] sm:$0xff] %v1490
      %1555 = vst [vmem:[#allocation8 + $0x1c0] sm:$0xff] %v1491
      %1556 = vst [vmem:[#allocation8 + $0x1c8] sm:$0xff] %v1492
      %1557 = vst [vmem:[#allocation8 + $0x1d0] sm:$0xff] %v1493
      %1558 = vst [vmem:[#allocation8 + $0x1d8] sm:$0xff] %v1494
      %1559 = vst [vmem:[#allocation8 + $0x1e0] sm:$0xff] %v1495
      %1560 = vst [vmem:[#allocation8 + $0x1e8] sm:$0xff] %v1496
      %1561 = vst [vmem:[#allocation8 + $0x1f0] sm:$0xff] %v1497
      %1562 = vst [vmem:[#allocation8 + $0x1f8] sm:$0xff] %v1498
    $region29: #{tpu_custom_call.1} parent=1 // pred_fallthru
      _
    // Predicated region
    $region30: #{tpu_custom_call.1} parent=1 // pred_check
      _
    $region31: #{tpu_custom_call.1} parent=1 // pred_check_branch
      %1564 = sbr.rel (0) target = $region33
    $region32: #{tpu_custom_call.1} parent=1 // pred_region
      %s1566 = ssub.s32 8192, 8192
      %1567 = vsyncadd [#allocation5], %s1566
      %s1568 = sshll.u32 [#allocation8], 4
      %s1569 = int_to_ptr.vmem [resolvable:$true] %s1568
      %1574 = dma.vmem_to_hbm [thread:$0]  %s1569, 8192, %s3, [#allocation5], 128, 128, 8
    $region33: #{tpu_custom_call.1} parent=1 // pred_fallthru
      _
    // Predicated region
    $region34: #{tpu_custom_call.1} parent=1 // pred_check
      _
    $region35: #{tpu_custom_call.1} parent=1 // pred_check_branch
      %1576 = sbr.rel (0) target = $region37
    $region36: #{tpu_custom_call.1} parent=1 // pred_region
      %1577 = dma.done [#allocation5], 8192
    $region37: #{tpu_custom_call.1} parent=1 // pred_fallthru
      _
    %1578 = vsyncpa [#allocation4], 1
    %1579 = vsyncpa [#allocation7], 1
    %1580 = vsyncpa [#allocation5], 1

</llo_original>
